<compile_context>
chip_gen: v7x
topology: tpu7x:2x2x1
jax: 0.10.0
libtpu: 0.0.40
codegen_flags: <defaults>
</compile_context>

<pallas_src>
import math
from functools import partial

import jax
import jax.numpy as jnp
import numpy as np
from jax import lax
from jax.experimental import pallas as pl
from jax.experimental.pallas import tpu as pltpu


# ------------------------------ Pallas kernel --------------------------------

def _layernorm_f32(x, g, b):
    mean = jnp.mean(x, axis=-1, keepdims=True)
    xc = x - mean
    var = jnp.mean(xc * xc, axis=-1, keepdims=True)
    return xc * lax.rsqrt(var + 1e-5) * g + b


def _encoder_layer_kernel(x_ref,
                          g1_ref, b1_ref, wqkv_ref, bqkv_ref, wo_ref, bo_ref,
                          g2_ref, b2_ref, w1_ref, bf1_ref, w2_ref, bf2_ref,
                          o_ref, *, num_heads, head_dim, scale, compute_dtype):
    """One batch element per grid step, fully fused:
       LN1 -> fused QKV -> per-head attention (out-proj folded in) -> residual
       -> LN2 -> FFN1 -> ReLU -> FFN2 -> residual."""
    cd = compute_dtype
    x = x_ref[...].astype(jnp.float32)                     # (L, E)
    L, E = x.shape
    H, d = num_heads, head_dim

    # ---------------- attention sub-layer ----------------
    xn = _layernorm_f32(x, g1_ref[...].astype(jnp.float32),
                        b1_ref[...].astype(jnp.float32))
    # Fused QKV projection; weight already (E, 3E) so this is a plain A @ B.
    qkv = jnp.dot(xn.astype(cd), wqkv_ref[...],
                  preferred_element_type=jnp.float32)
    qkv = qkv + bqkv_ref[...].astype(jnp.float32)          # (L, 3E)

    # Residual + out-projection bias; per-head contributions accumulate below.
    y = x + bo_ref[...].astype(jnp.float32)

    # NOTE: full (L, L) scores per head.  For long utterances (L >~ 1024)
    # switch this loop to KV-tiled online softmax (flash-style) to cap VMEM.
    for h in range(H):                                     # static unroll
        lo = h * d
        qh = (qkv[:, lo:lo + d] * scale).astype(cd)        # (L, d)
        kh = qkv[:, E + lo:E + lo + d].astype(cd)
        vh = qkv[:, 2 * E + lo:2 * E + lo + d].astype(cd)

        s = lax.dot_general(qh, kh, (((1,), (1,)), ((), ())),
                            preferred_element_type=jnp.float32)   # (L, L)
        s = s - jnp.max(s, axis=-1, keepdims=True)
        p = jnp.exp(s)
        denom = jnp.sum(p, axis=-1, keepdims=True)
        inv = pl.reciprocal(denom, approx=True)            # EUP slot
        inv = inv * (2.0 - denom * inv)                    # one Newton step
        oh = jnp.dot((p * inv).astype(cd), vh,
                     preferred_element_type=jnp.float32)   # (L, d)

        # Fold the out-projection into the head loop: rows [lo:lo+d] of Wo.
        # No concat, no (L, E) attention scratch.
        y = y + jnp.dot(oh.astype(cd), wo_ref[lo:lo + d, :],
                        preferred_element_type=jnp.float32)

    # ---------------- FFN sub-layer ----------------
    yn = _layernorm_f32(y, g2_ref[...].astype(jnp.float32),
                        b2_ref[...].astype(jnp.float32))
    hmid = jnp.dot(yn.astype(cd), w1_ref[...],
                   preferred_element_type=jnp.float32)
    hmid = jnp.maximum(hmid + bf1_ref[...].astype(jnp.float32), 0.0)
    out = y + jnp.dot(hmid.astype(cd), w2_ref[...],
                      preferred_element_type=jnp.float32)
    out = out + bf2_ref[...].astype(jnp.float32)

    o_ref[...] = out.astype(o_ref.dtype)


# -------------------------------- wrapper -------------------------------------

def transformer_encoder_layer(x, params, *, compute_dtype=jnp.float32):
    """Pre-norm TransformerEncoderLayer forward, x: (L, N, E), seq-first.

    compute_dtype: matmul operand dtype. bf16 recommended for production on
    v6e/v7x (MXU throughput, halved resident-weight VMEM / HBM bytes); f32
    kept as default so the strict check against the f32 reference holds.
    Accumulation is always f32 (preferred_element_type).
    """
    L, N, E = x.shape
    H = params["num_heads"]
    d = E // H
    dtype = x.dtype
    cd = compute_dtype

    # Weights: pre-transpose ONCE to (in, out) and cast ONCE to the operand
    # dtype (amortized over all grid steps; no in-kernel weight transpose/cast).
    wqkv = params["in_proj_w"].T.astype(cd)                # (E, 3E)
    wo = params["out_proj_w"].T.astype(cd)                 # (E, E)
    w1 = params["w1"].T.astype(cd)                         # (E, HID)
    w2 = params["w2"].T.astype(cd)                         # (HID, E)
    b1 = params["b1"]
    HID = w1.shape[1]

    # Zero-pad FFN hidden dim to a lane-dense multiple of 128 (exact math;
    # no-op at real SpeechTransformer sizes, e.g. HID=2048).
    HIDp = max(128, ((HID + 127) // 128) * 128)
    if HIDp != HID:
        w1 = jnp.pad(w1, ((0, 0), (0, HIDp - HID)))
        w2 = jnp.pad(w2, ((0, HIDp - HID), (0, 0)))
        b1 = jnp.pad(b1, (0, HIDp - HID))

    # Batch-major so each grid step owns a lane-dense (L, E) slab.
    # TODO(synk): replace these two boundary transposes with a squeezed-batch
    #             BlockSpec on the seq-first layout once the strided-batch DMA
    #             path is validated; kept explicit here for portability.
    xb = jnp.transpose(x, (1, 0, 2))                       # (N, L, E)

    row = pl.BlockSpec((None, L, E), lambda n: (n, 0, 0))  # one batch per step
    const = lambda shape: pl.BlockSpec(shape, lambda n: (0, 0))  # resident

    yb = pl.pallas_call(
        partial(_encoder_layer_kernel, num_heads=H, head_dim=d,
                scale=1.0 / math.sqrt(d), compute_dtype=cd),
        out_shape=jax.ShapeDtypeStruct((N, L, E), dtype),
        grid=(N,),
        in_specs=[row,
                  const((1, E)), const((1, E)),            # ln1 gamma/beta
                  const((E, 3 * E)), const((1, 3 * E)),    # qkv proj w/b
                  const((E, E)), const((1, E)),            # out proj w/b
                  const((1, E)), const((1, E)),            # ln2 gamma/beta
                  const((E, HIDp)), const((1, HIDp)),      # ffn1 w/b
                  const((HIDp, E)), const((1, E))],        # ffn2 w/b
        out_specs=row,
        compiler_params=pltpu.CompilerParams(
            dimension_semantics=("parallel",),
            vmem_limit_bytes=64 * 1024 * 1024),
    )(xb,
      params["ln1_g"].reshape(1, E), params["ln1_b"].reshape(1, E),
      wqkv, params["in_proj_b"].reshape(1, 3 * E),
      wo, params["out_proj_b"].reshape(1, E),
      params["ln2_g"].reshape(1, E), params["ln2_b"].reshape(1, E),
      w1, b1.reshape(1, HIDp),
      w2, params["b2"].reshape(1, E))

    return jnp.transpose(yb, (1, 0, 2))                    # back to (L, N, E)


# ------------------------- pure-JAX reference check ---------------------------

def reference_forward(x, p):
    L, N, E = x.shape
    H = p["num_heads"]
    d = E // H

    def ln(t, g, b):
        m = jnp.mean(t, -1, keepdims=True)
        v = jnp.mean((t - m) ** 2, -1, keepdims=True)
        return (t - m) / jnp.sqrt(v + 1e-5) * g + b

    xn = ln(x, p["ln1_g"], p["ln1_b"])
    qkv = xn @ p["in_proj_w"].T + p["in_proj_b"]
    q, k, v = jnp.split(qkv, 3, axis=-1)

    def heads(t):  # (L, N, E) -> (N, H, L, d)
        return t.reshape(L, N, H, d).transpose(1, 2, 0, 3)

    qh, kh, vh = heads(q), heads(k), heads(v)
    s = jnp.einsum("nhld,nhmd->nhlm", qh, kh) / math.sqrt(d)
    a = jax.nn.softmax(s, axis=-1)
    o = jnp.einsum("nhlm,nhmd->nhld", a, vh).transpose(2, 0, 1, 3).reshape(L, N, E)
    x = x + (o @ p["out_proj_w"].T + p["out_proj_b"])
    xn = ln(x, p["ln2_g"], p["ln2_b"])
    h = jax.nn.relu(xn @ p["w1"].T + p["b1"])
    x = x + (h @ p["w2"].T + p["b2"])
    return x


# ----------------------------------- main --------------------------------------

if __name__ == "__main__":
    # Small, module-consistent shapes
    L, N = 8, 2            # seq_len, batch
    E, H = 32, 4           # input_dim, num_heads
    HID = 64               # hidden_dim
    # dropout_prob = 0.1   # identity at inference

    key = jax.random.PRNGKey(0)
    ks = jax.random.split(key, 12)

    params = {
        "num_heads": H,
        "ln1_g": 1.0 + 0.1 * jax.random.normal(ks[0], (E,), jnp.float32),
        "ln1_b": 0.1 * jax.random.normal(ks[1], (E,), jnp.float32),
        "in_proj_w": 0.1 * jax.random.normal(ks[2], (3 * E, E), jnp.float32),
        "in_proj_b": 0.05 * jax.random.normal(ks[3], (3 * E,), jnp.float32),
        "out_proj_w": 0.1 * jax.random.normal(ks[4], (E, E), jnp.float32),
        "out_proj_b": 0.05 * jax.random.normal(ks[5], (E,), jnp.float32),
        "ln2_g": 1.0 + 0.1 * jax.random.normal(ks[6], (E,), jnp.float32),
        "ln2_b": 0.1 * jax.random.normal(ks[7], (E,), jnp.float32),
        "w1": 0.1 * jax.random.normal(ks[8], (HID, E), jnp.float32),
        "b1": 0.05 * jax.random.normal(ks[9], (HID,), jnp.float32),
        "w2": 0.1 * jax.random.normal(ks[10], (E, HID), jnp.float32),
        "b2": 0.05 * jax.random.normal(ks[11], (E,), jnp.float32),
    }

    x = jax.random.normal(key, (L, N, E), jnp.float32)

    out = transformer_encoder_layer(x, params)
    out = jax.block_until_ready(out)

    # Reference at highest matmul precision so the comparison is apples-to-apples
    # with the kernel's f32-accumulated MXU matmuls.
    with jax.default_matmul_precision("highest"):
        ref = jax.block_until_ready(reference_forward(x, params))

    # Tolerance covers the EUP approx-reciprocal (+ Newton) softmax
    # normalization and differing matmul summation orders; real bugs would
    # produce O(0.1-1) errors.
    np.testing.assert_allclose(np.asarray(out), np.asarray(ref),
                               rtol=2e-3, atol=2e-3)

    print("KERNEL_OK")
</pallas_src>

<mosaic_0001>
module attributes {stable_mosaic.version = 11 : i64} {
  func.func @_encoder_layer_kernel(%arg0: i32, %arg1: memref<1x8x32xf32, #tpu.memory_space<vmem>>, %arg2: memref<1x32xf32, #tpu.memory_space<vmem>>, %arg3: memref<1x32xf32, #tpu.memory_space<vmem>>, %arg4: memref<32x96xf32, #tpu.memory_space<vmem>>, %arg5: memref<1x96xf32, #tpu.memory_space<vmem>>, %arg6: memref<32x32xf32, #tpu.memory_space<vmem>>, %arg7: memref<1x32xf32, #tpu.memory_space<vmem>>, %arg8: memref<1x32xf32, #tpu.memory_space<vmem>>, %arg9: memref<1x32xf32, #tpu.memory_space<vmem>>, %arg10: memref<32x128xf32, #tpu.memory_space<vmem>>, %arg11: memref<1x128xf32, #tpu.memory_space<vmem>>, %arg12: memref<128x32xf32, #tpu.memory_space<vmem>>, %arg13: memref<1x32xf32, #tpu.memory_space<vmem>>, %arg14: memref<1x8x32xf32, #tpu.memory_space<vmem>>) attributes {dimension_semantics = [#tpu.dimension_semantics<parallel>], iteration_bounds = array<i64: 2>, scalar_prefetch = 0 : i64, scratch_operands = 0 : i64, tpu.core_type = #tpu.core_type<tc>, window_params = [{transform_indices = @transform_0, window_bounds = array<i64: 1, 8, 32>}, {pipeline_mode = #tpu.pipeline_mode<synchronous>, transform_indices = @transform_1, window_bounds = array<i64: 1, 32>}, {pipeline_mode = #tpu.pipeline_mode<synchronous>, transform_indices = @transform_2, window_bounds = array<i64: 1, 32>}, {pipeline_mode = #tpu.pipeline_mode<synchronous>, transform_indices = @transform_3, window_bounds = array<i64: 32, 96>}, {pipeline_mode = #tpu.pipeline_mode<synchronous>, transform_indices = @transform_4, window_bounds = array<i64: 1, 96>}, {pipeline_mode = #tpu.pipeline_mode<synchronous>, transform_indices = @transform_5, window_bounds = array<i64: 32, 32>}, {pipeline_mode = #tpu.pipeline_mode<synchronous>, transform_indices = @transform_6, window_bounds = array<i64: 1, 32>}, {pipeline_mode = #tpu.pipeline_mode<synchronous>, transform_indices = @transform_7, window_bounds = array<i64: 1, 32>}, {pipeline_mode = #tpu.pipeline_mode<synchronous>, transform_indices = @transform_8, window_bounds = array<i64: 1, 32>}, {pipeline_mode = #tpu.pipeline_mode<synchronous>, transform_indices = @transform_9, window_bounds = array<i64: 32, 128>}, {pipeline_mode = #tpu.pipeline_mode<synchronous>, transform_indices = @transform_10, window_bounds = array<i64: 1, 128>}, {pipeline_mode = #tpu.pipeline_mode<synchronous>, transform_indices = @transform_11, window_bounds = array<i64: 128, 32>}, {pipeline_mode = #tpu.pipeline_mode<synchronous>, transform_indices = @transform_12, window_bounds = array<i64: 1, 32>}, {transform_indices = @transform_13, window_bounds = array<i64: 1, 8, 32>}]} {
    %c0 = arith.constant 0 : index
    %c0_0 = arith.constant 0 : index
    %c0_1 = arith.constant 0 : index
    %0 = vector.load %arg1[%c0, %c0_0, %c0_1] : memref<1x8x32xf32, #tpu.memory_space<vmem>>, vector<1x8x32xf32>
    %1 = vector.shape_cast %0 : vector<1x8x32xf32> to vector<8x32xf32>
    %c0_2 = arith.constant 0 : index
    %c0_3 = arith.constant 0 : index
    %2 = vector.load %arg2[%c0_2, %c0_3] : memref<1x32xf32, #tpu.memory_space<vmem>>, vector<1x32xf32>
    %c0_4 = arith.constant 0 : index
    %c0_5 = arith.constant 0 : index
    %3 = vector.load %arg3[%c0_4, %c0_5] : memref<1x32xf32, #tpu.memory_space<vmem>>, vector<1x32xf32>
    %cst = arith.constant dense<0.000000e+00> : vector<8xf32>
    %4 = vector.multi_reduction <add>, %1, %cst [1] : vector<8x32xf32> to vector<8xf32>
    %5 = vector.shape_cast %4 : vector<8xf32> to vector<8x1xf32>
    %cst_6 = arith.constant 3.200000e+01 : f32
    %6 = vector.broadcast %cst_6 : f32 to vector<8x1xf32>
    %7 = arith.divf %5, %6 : vector<8x1xf32>
    %8 = vector.broadcast %7 : vector<8x1xf32> to vector<8x32xf32>
    %9 = arith.subf %1, %8 : vector<8x32xf32>
    %10 = arith.mulf %9, %9 : vector<8x32xf32>
    %cst_7 = arith.constant dense<0.000000e+00> : vector<8xf32>
    %11 = vector.multi_reduction <add>, %10, %cst_7 [1] : vector<8x32xf32> to vector<8xf32>
    %12 = vector.shape_cast %11 : vector<8xf32> to vector<8x1xf32>
    %cst_8 = arith.constant 3.200000e+01 : f32
    %13 = vector.broadcast %cst_8 : f32 to vector<8x1xf32>
    %14 = arith.divf %12, %13 : vector<8x1xf32>
    %cst_9 = arith.constant 9.99999974E-6 : f32
    %15 = vector.broadcast %cst_9 : f32 to vector<8x1xf32>
    %16 = arith.addf %14, %15 : vector<8x1xf32>
    %17 = math.rsqrt %16 : vector<8x1xf32>
    %18 = vector.broadcast %17 : vector<8x1xf32> to vector<8x32xf32>
    %19 = arith.mulf %9, %18 : vector<8x32xf32>
    %20 = vector.broadcast %2 : vector<1x32xf32> to vector<8x32xf32>
    %21 = arith.mulf %19, %20 : vector<8x32xf32>
    %22 = vector.broadcast %3 : vector<1x32xf32> to vector<8x32xf32>
    %23 = arith.addf %21, %22 : vector<8x32xf32>
    %c0_10 = arith.constant 0 : index
    %c0_11 = arith.constant 0 : index
    %24 = vector.load %arg4[%c0_10, %c0_11] : memref<32x96xf32, #tpu.memory_space<vmem>>, vector<32x96xf32>
    %cst_12 = arith.constant dense<0.000000e+00> : vector<8x96xf32>
    %25 = tpu.matmul %23, %24, %cst_12 {dimension_numbers = #tpu.dot_dimension_numbers<[1], [0], [0], [1], [0, 0, 1, 1], [], []>} : vector<8x32xf32>, vector<32x96xf32>, vector<8x96xf32> -> vector<8x96xf32>
    %c0_13 = arith.constant 0 : index
    %c0_14 = arith.constant 0 : index
    %26 = vector.load %arg5[%c0_13, %c0_14] : memref<1x96xf32, #tpu.memory_space<vmem>>, vector<1x96xf32>
    %27 = vector.broadcast %26 : vector<1x96xf32> to vector<8x96xf32>
    %28 = arith.addf %25, %27 : vector<8x96xf32>
    %c0_15 = arith.constant 0 : index
    %c0_16 = arith.constant 0 : index
    %29 = vector.load %arg7[%c0_15, %c0_16] : memref<1x32xf32, #tpu.memory_space<vmem>>, vector<1x32xf32>
    %30 = vector.broadcast %29 : vector<1x32xf32> to vector<8x32xf32>
    %31 = arith.addf %1, %30 : vector<8x32xf32>
    %32 = vector.extract_strided_slice %28 {offsets = [0, 0], sizes = [8, 8], strides = [1, 1]} : vector<8x96xf32> to vector<8x8xf32>
    %cst_17 = arith.constant 0.353553385 : f32
    %33 = vector.broadcast %cst_17 : f32 to vector<8x8xf32>
    %34 = arith.mulf %32, %33 : vector<8x8xf32>
    %35 = vector.extract_strided_slice %28 {offsets = [0, 32], sizes = [8, 8], strides = [1, 1]} : vector<8x96xf32> to vector<8x8xf32>
    %36 = vector.extract_strided_slice %28 {offsets = [0, 64], sizes = [8, 8], strides = [1, 1]} : vector<8x96xf32> to vector<8x8xf32>
    %cst_18 = arith.constant dense<0.000000e+00> : vector<8x8xf32>
    %37 = tpu.matmul %34, %35, %cst_18 {dimension_numbers = #tpu.dot_dimension_numbers<[1], [1], [0], [0], [0, 0, 1, 0], [], []>} : vector<8x8xf32>, vector<8x8xf32>, vector<8x8xf32> -> vector<8x8xf32>
    %cst_19 = arith.constant dense<0xFF800000> : vector<8xf32>
    %38 = vector.multi_reduction <maximumf>, %37, %cst_19 [1] : vector<8x8xf32> to vector<8xf32>
    %39 = vector.shape_cast %38 : vector<8xf32> to vector<8x1xf32>
    %40 = vector.broadcast %39 : vector<8x1xf32> to vector<8x8xf32>
    %41 = arith.subf %37, %40 : vector<8x8xf32>
    %42 = math.exp %41 : vector<8x8xf32>
    %cst_20 = arith.constant dense<0.000000e+00> : vector<8xf32>
    %43 = vector.multi_reduction <add>, %42, %cst_20 [1] : vector<8x8xf32> to vector<8xf32>
    %44 = vector.shape_cast %43 : vector<8xf32> to vector<8x1xf32>
    %45 = tpu.reciprocal %44 {approx = true} : vector<8x1xf32> -> vector<8x1xf32>
    %46 = arith.mulf %44, %45 : vector<8x1xf32>
    %cst_21 = arith.constant 2.000000e+00 : f32
    %47 = vector.broadcast %cst_21 : f32 to vector<8x1xf32>
    %48 = arith.subf %47, %46 : vector<8x1xf32>
    %49 = arith.mulf %45, %48 : vector<8x1xf32>
    %50 = vector.broadcast %49 : vector<8x1xf32> to vector<8x8xf32>
    %51 = arith.mulf %42, %50 : vector<8x8xf32>
    %cst_22 = arith.constant dense<0.000000e+00> : vector<8x8xf32>
    %52 = tpu.matmul %51, %36, %cst_22 {dimension_numbers = #tpu.dot_dimension_numbers<[1], [0], [0], [1], [0, 0, 1, 1], [], []>} : vector<8x8xf32>, vector<8x8xf32>, vector<8x8xf32> -> vector<8x8xf32>
    %c0_23 = arith.constant 0 : index
    %c0_24 = arith.constant 0 : index
    %53 = vector.load %arg6[%c0_23, %c0_24] : memref<32x32xf32, #tpu.memory_space<vmem>>, vector<8x32xf32>
    %cst_25 = arith.constant dense<0.000000e+00> : vector<8x32xf32>
    %54 = tpu.matmul %52, %53, %cst_25 {dimension_numbers = #tpu.dot_dimension_numbers<[1], [0], [0], [1], [0, 0, 1, 1], [], []>} : vector<8x8xf32>, vector<8x32xf32>, vector<8x32xf32> -> vector<8x32xf32>
    %55 = arith.addf %31, %54 : vector<8x32xf32>
    %56 = vector.extract_strided_slice %28 {offsets = [0, 8], sizes = [8, 8], strides = [1, 1]} : vector<8x96xf32> to vector<8x8xf32>
    %cst_26 = arith.constant 0.353553385 : f32
    %57 = vector.broadcast %cst_26 : f32 to vector<8x8xf32>
    %58 = arith.mulf %56, %57 : vector<8x8xf32>
    %59 = vector.extract_strided_slice %28 {offsets = [0, 40], sizes = [8, 8], strides = [1, 1]} : vector<8x96xf32> to vector<8x8xf32>
    %60 = vector.extract_strided_slice %28 {offsets = [0, 72], sizes = [8, 8], strides = [1, 1]} : vector<8x96xf32> to vector<8x8xf32>
    %cst_27 = arith.constant dense<0.000000e+00> : vector<8x8xf32>
    %61 = tpu.matmul %58, %59, %cst_27 {dimension_numbers = #tpu.dot_dimension_numbers<[1], [1], [0], [0], [0, 0, 1, 0], [], []>} : vector<8x8xf32>, vector<8x8xf32>, vector<8x8xf32> -> vector<8x8xf32>
    %cst_28 = arith.constant dense<0xFF800000> : vector<8xf32>
    %62 = vector.multi_reduction <maximumf>, %61, %cst_28 [1] : vector<8x8xf32> to vector<8xf32>
    %63 = vector.shape_cast %62 : vector<8xf32> to vector<8x1xf32>
    %64 = vector.broadcast %63 : vector<8x1xf32> to vector<8x8xf32>
    %65 = arith.subf %61, %64 : vector<8x8xf32>
    %66 = math.exp %65 : vector<8x8xf32>
    %cst_29 = arith.constant dense<0.000000e+00> : vector<8xf32>
    %67 = vector.multi_reduction <add>, %66, %cst_29 [1] : vector<8x8xf32> to vector<8xf32>
    %68 = vector.shape_cast %67 : vector<8xf32> to vector<8x1xf32>
    %69 = tpu.reciprocal %68 {approx = true} : vector<8x1xf32> -> vector<8x1xf32>
    %70 = arith.mulf %68, %69 : vector<8x1xf32>
    %cst_30 = arith.constant 2.000000e+00 : f32
    %71 = vector.broadcast %cst_30 : f32 to vector<8x1xf32>
    %72 = arith.subf %71, %70 : vector<8x1xf32>
    %73 = arith.mulf %69, %72 : vector<8x1xf32>
    %74 = vector.broadcast %73 : vector<8x1xf32> to vector<8x8xf32>
    %75 = arith.mulf %66, %74 : vector<8x8xf32>
    %cst_31 = arith.constant dense<0.000000e+00> : vector<8x8xf32>
    %76 = tpu.matmul %75, %60, %cst_31 {dimension_numbers = #tpu.dot_dimension_numbers<[1], [0], [0], [1], [0, 0, 1, 1], [], []>} : vector<8x8xf32>, vector<8x8xf32>, vector<8x8xf32> -> vector<8x8xf32>
    %c8 = arith.constant 8 : index
    %c0_32 = arith.constant 0 : index
    %77 = vector.load %arg6[%c8, %c0_32] : memref<32x32xf32, #tpu.memory_space<vmem>>, vector<8x32xf32>
    %cst_33 = arith.constant dense<0.000000e+00> : vector<8x32xf32>
    %78 = tpu.matmul %76, %77, %cst_33 {dimension_numbers = #tpu.dot_dimension_numbers<[1], [0], [0], [1], [0, 0, 1, 1], [], []>} : vector<8x8xf32>, vector<8x32xf32>, vector<8x32xf32> -> vector<8x32xf32>
    %79 = arith.addf %55, %78 : vector<8x32xf32>
    %80 = vector.extract_strided_slice %28 {offsets = [0, 16], sizes = [8, 8], strides = [1, 1]} : vector<8x96xf32> to vector<8x8xf32>
    %cst_34 = arith.constant 0.353553385 : f32
    %81 = vector.broadcast %cst_34 : f32 to vector<8x8xf32>
    %82 = arith.mulf %80, %81 : vector<8x8xf32>
    %83 = vector.extract_strided_slice %28 {offsets = [0, 48], sizes = [8, 8], strides = [1, 1]} : vector<8x96xf32> to vector<8x8xf32>
    %84 = vector.extract_strided_slice %28 {offsets = [0, 80], sizes = [8, 8], strides = [1, 1]} : vector<8x96xf32> to vector<8x8xf32>
    %cst_35 = arith.constant dense<0.000000e+00> : vector<8x8xf32>
    %85 = tpu.matmul %82, %83, %cst_35 {dimension_numbers = #tpu.dot_dimension_numbers<[1], [1], [0], [0], [0, 0, 1, 0], [], []>} : vector<8x8xf32>, vector<8x8xf32>, vector<8x8xf32> -> vector<8x8xf32>
    %cst_36 = arith.constant dense<0xFF800000> : vector<8xf32>
    %86 = vector.multi_reduction <maximumf>, %85, %cst_36 [1] : vector<8x8xf32> to vector<8xf32>
    %87 = vector.shape_cast %86 : vector<8xf32> to vector<8x1xf32>
    %88 = vector.broadcast %87 : vector<8x1xf32> to vector<8x8xf32>
    %89 = arith.subf %85, %88 : vector<8x8xf32>
    %90 = math.exp %89 : vector<8x8xf32>
    %cst_37 = arith.constant dense<0.000000e+00> : vector<8xf32>
    %91 = vector.multi_reduction <add>, %90, %cst_37 [1] : vector<8x8xf32> to vector<8xf32>
    %92 = vector.shape_cast %91 : vector<8xf32> to vector<8x1xf32>
    %93 = tpu.reciprocal %92 {approx = true} : vector<8x1xf32> -> vector<8x1xf32>
    %94 = arith.mulf %92, %93 : vector<8x1xf32>
    %cst_38 = arith.constant 2.000000e+00 : f32
    %95 = vector.broadcast %cst_38 : f32 to vector<8x1xf32>
    %96 = arith.subf %95, %94 : vector<8x1xf32>
    %97 = arith.mulf %93, %96 : vector<8x1xf32>
    %98 = vector.broadcast %97 : vector<8x1xf32> to vector<8x8xf32>
    %99 = arith.mulf %90, %98 : vector<8x8xf32>
    %cst_39 = arith.constant dense<0.000000e+00> : vector<8x8xf32>
    %100 = tpu.matmul %99, %84, %cst_39 {dimension_numbers = #tpu.dot_dimension_numbers<[1], [0], [0], [1], [0, 0, 1, 1], [], []>} : vector<8x8xf32>, vector<8x8xf32>, vector<8x8xf32> -> vector<8x8xf32>
    %c16 = arith.constant 16 : index
    %c0_40 = arith.constant 0 : index
    %101 = vector.load %arg6[%c16, %c0_40] : memref<32x32xf32, #tpu.memory_space<vmem>>, vector<8x32xf32>
    %cst_41 = arith.constant dense<0.000000e+00> : vector<8x32xf32>
    %102 = tpu.matmul %100, %101, %cst_41 {dimension_numbers = #tpu.dot_dimension_numbers<[1], [0], [0], [1], [0, 0, 1, 1], [], []>} : vector<8x8xf32>, vector<8x32xf32>, vector<8x32xf32> -> vector<8x32xf32>
    %103 = arith.addf %79, %102 : vector<8x32xf32>
    %104 = vector.extract_strided_slice %28 {offsets = [0, 24], sizes = [8, 8], strides = [1, 1]} : vector<8x96xf32> to vector<8x8xf32>
    %cst_42 = arith.constant 0.353553385 : f32
    %105 = vector.broadcast %cst_42 : f32 to vector<8x8xf32>
    %106 = arith.mulf %104, %105 : vector<8x8xf32>
    %107 = vector.extract_strided_slice %28 {offsets = [0, 56], sizes = [8, 8], strides = [1, 1]} : vector<8x96xf32> to vector<8x8xf32>
    %108 = vector.extract_strided_slice %28 {offsets = [0, 88], sizes = [8, 8], strides = [1, 1]} : vector<8x96xf32> to vector<8x8xf32>
    %cst_43 = arith.constant dense<0.000000e+00> : vector<8x8xf32>
    %109 = tpu.matmul %106, %107, %cst_43 {dimension_numbers = #tpu.dot_dimension_numbers<[1], [1], [0], [0], [0, 0, 1, 0], [], []>} : vector<8x8xf32>, vector<8x8xf32>, vector<8x8xf32> -> vector<8x8xf32>
    %cst_44 = arith.constant dense<0xFF800000> : vector<8xf32>
    %110 = vector.multi_reduction <maximumf>, %109, %cst_44 [1] : vector<8x8xf32> to vector<8xf32>
    %111 = vector.shape_cast %110 : vector<8xf32> to vector<8x1xf32>
    %112 = vector.broadcast %111 : vector<8x1xf32> to vector<8x8xf32>
    %113 = arith.subf %109, %112 : vector<8x8xf32>
    %114 = math.exp %113 : vector<8x8xf32>
    %cst_45 = arith.constant dense<0.000000e+00> : vector<8xf32>
    %115 = vector.multi_reduction <add>, %114, %cst_45 [1] : vector<8x8xf32> to vector<8xf32>
    %116 = vector.shape_cast %115 : vector<8xf32> to vector<8x1xf32>
    %117 = tpu.reciprocal %116 {approx = true} : vector<8x1xf32> -> vector<8x1xf32>
    %118 = arith.mulf %116, %117 : vector<8x1xf32>
    %cst_46 = arith.constant 2.000000e+00 : f32
    %119 = vector.broadcast %cst_46 : f32 to vector<8x1xf32>
    %120 = arith.subf %119, %118 : vector<8x1xf32>
    %121 = arith.mulf %117, %120 : vector<8x1xf32>
    %122 = vector.broadcast %121 : vector<8x1xf32> to vector<8x8xf32>
    %123 = arith.mulf %114, %122 : vector<8x8xf32>
    %cst_47 = arith.constant dense<0.000000e+00> : vector<8x8xf32>
    %124 = tpu.matmul %123, %108, %cst_47 {dimension_numbers = #tpu.dot_dimension_numbers<[1], [0], [0], [1], [0, 0, 1, 1], [], []>} : vector<8x8xf32>, vector<8x8xf32>, vector<8x8xf32> -> vector<8x8xf32>
    %c24 = arith.constant 24 : index
    %c0_48 = arith.constant 0 : index
    %125 = vector.load %arg6[%c24, %c0_48] : memref<32x32xf32, #tpu.memory_space<vmem>>, vector<8x32xf32>
    %cst_49 = arith.constant dense<0.000000e+00> : vector<8x32xf32>
    %126 = tpu.matmul %124, %125, %cst_49 {dimension_numbers = #tpu.dot_dimension_numbers<[1], [0], [0], [1], [0, 0, 1, 1], [], []>} : vector<8x8xf32>, vector<8x32xf32>, vector<8x32xf32> -> vector<8x32xf32>
    %127 = arith.addf %103, %126 : vector<8x32xf32>
    %c0_50 = arith.constant 0 : index
    %c0_51 = arith.constant 0 : index
    %128 = vector.load %arg8[%c0_50, %c0_51] : memref<1x32xf32, #tpu.memory_space<vmem>>, vector<1x32xf32>
    %c0_52 = arith.constant 0 : index
    %c0_53 = arith.constant 0 : index
    %129 = vector.load %arg9[%c0_52, %c0_53] : memref<1x32xf32, #tpu.memory_space<vmem>>, vector<1x32xf32>
    %cst_54 = arith.constant dense<0.000000e+00> : vector<8xf32>
    %130 = vector.multi_reduction <add>, %127, %cst_54 [1] : vector<8x32xf32> to vector<8xf32>
    %131 = vector.shape_cast %130 : vector<8xf32> to vector<8x1xf32>
    %cst_55 = arith.constant 3.200000e+01 : f32
    %132 = vector.broadcast %cst_55 : f32 to vector<8x1xf32>
    %133 = arith.divf %131, %132 : vector<8x1xf32>
    %134 = vector.broadcast %133 : vector<8x1xf32> to vector<8x32xf32>
    %135 = arith.subf %127, %134 : vector<8x32xf32>
    %136 = arith.mulf %135, %135 : vector<8x32xf32>
    %cst_56 = arith.constant dense<0.000000e+00> : vector<8xf32>
    %137 = vector.multi_reduction <add>, %136, %cst_56 [1] : vector<8x32xf32> to vector<8xf32>
    %138 = vector.shape_cast %137 : vector<8xf32> to vector<8x1xf32>
    %cst_57 = arith.constant 3.200000e+01 : f32
    %139 = vector.broadcast %cst_57 : f32 to vector<8x1xf32>
    %140 = arith.divf %138, %139 : vector<8x1xf32>
    %cst_58 = arith.constant 9.99999974E-6 : f32
    %141 = vector.broadcast %cst_58 : f32 to vector<8x1xf32>
    %142 = arith.addf %140, %141 : vector<8x1xf32>
    %143 = math.rsqrt %142 : vector<8x1xf32>
    %144 = vector.broadcast %143 : vector<8x1xf32> to vector<8x32xf32>
    %145 = arith.mulf %135, %144 : vector<8x32xf32>
    %146 = vector.broadcast %128 : vector<1x32xf32> to vector<8x32xf32>
    %147 = arith.mulf %145, %146 : vector<8x32xf32>
    %148 = vector.broadcast %129 : vector<1x32xf32> to vector<8x32xf32>
    %149 = arith.addf %147, %148 : vector<8x32xf32>
    %c0_59 = arith.constant 0 : index
    %c0_60 = arith.constant 0 : index
    %150 = vector.load %arg10[%c0_59, %c0_60] : memref<32x128xf32, #tpu.memory_space<vmem>>, vector<32x128xf32>
    %cst_61 = arith.constant dense<0.000000e+00> : vector<8x128xf32>
    %151 = tpu.matmul %149, %150, %cst_61 {dimension_numbers = #tpu.dot_dimension_numbers<[1], [0], [0], [1], [0, 0, 1, 1], [], []>} : vector<8x32xf32>, vector<32x128xf32>, vector<8x128xf32> -> vector<8x128xf32>
    %c0_62 = arith.constant 0 : index
    %c0_63 = arith.constant 0 : index
    %152 = vector.load %arg11[%c0_62, %c0_63] : memref<1x128xf32, #tpu.memory_space<vmem>>, vector<1x128xf32>
    %153 = vector.broadcast %152 : vector<1x128xf32> to vector<8x128xf32>
    %154 = arith.addf %151, %153 : vector<8x128xf32>
    %cst_64 = arith.constant 0.000000e+00 : f32
    %155 = vector.broadcast %cst_64 : f32 to vector<8x128xf32>
    %156 = arith.maximumf %154, %155 : vector<8x128xf32>
    %c0_65 = arith.constant 0 : index
    %c0_66 = arith.constant 0 : index
    %157 = vector.load %arg12[%c0_65, %c0_66] : memref<128x32xf32, #tpu.memory_space<vmem>>, vector<128x32xf32>
    %cst_67 = arith.constant dense<0.000000e+00> : vector<8x32xf32>
    %158 = tpu.matmul %156, %157, %cst_67 {dimension_numbers = #tpu.dot_dimension_numbers<[1], [0], [0], [1], [0, 0, 1, 1], [], []>} : vector<8x128xf32>, vector<128x32xf32>, vector<8x32xf32> -> vector<8x32xf32>
    %159 = arith.addf %127, %158 : vector<8x32xf32>
    %c0_68 = arith.constant 0 : index
    %c0_69 = arith.constant 0 : index
    %160 = vector.load %arg13[%c0_68, %c0_69] : memref<1x32xf32, #tpu.memory_space<vmem>>, vector<1x32xf32>
    %161 = vector.broadcast %160 : vector<1x32xf32> to vector<8x32xf32>
    %162 = arith.addf %159, %161 : vector<8x32xf32>
    %c0_70 = arith.constant 0 : index
    %c0_71 = arith.constant 0 : index
    %c0_72 = arith.constant 0 : index
    %163 = vector.load %arg14[%c0_70, %c0_71, %c0_72] : memref<1x8x32xf32, #tpu.memory_space<vmem>>, vector<1x8x32xf32>
    %164 = vector.shape_cast %163 : vector<1x8x32xf32> to vector<8x32xf32>
    %165 = vector.shape_cast %162 : vector<8x32xf32> to vector<1x8x32xf32>
    tpu.vector_store %arg14[%c0_70, %c0_71, %c0_72], %165 {strides = array<i32>} : memref<1x8x32xf32, #tpu.memory_space<vmem>>, vector<1x8x32xf32>,
    return
  }
  func.func @transform_0(%arg0: i32) -> (i32, i32, i32) {
    %c0_i32 = arith.constant 0 : i32
    %c0_i32_0 = arith.constant 0 : i32
    %c0_i32_1 = arith.constant 0 : i32
    return %arg0, %c0_i32, %c0_i32_0 : i32, i32, i32
  }
  func.func @transform_1(%arg0: i32) -> (i32, i32) {
    %c0_i32 = arith.constant 0 : i32
    %c0_i32_0 = arith.constant 0 : i32
    %c0_i32_1 = arith.constant 0 : i32
    return %c0_i32, %c0_i32_0 : i32, i32
  }
  func.func @transform_2(%arg0: i32) -> (i32, i32) {
    %c0_i32 = arith.constant 0 : i32
    %c0_i32_0 = arith.constant 0 : i32
    %c0_i32_1 = arith.constant 0 : i32
    return %c0_i32, %c0_i32_0 : i32, i32
  }
  func.func @transform_3(%arg0: i32) -> (i32, i32) {
    %c0_i32 = arith.constant 0 : i32
    %c0_i32_0 = arith.constant 0 : i32
    %c0_i32_1 = arith.constant 0 : i32
    return %c0_i32, %c0_i32_0 : i32, i32
  }
  func.func @transform_4(%arg0: i32) -> (i32, i32) {
    %c0_i32 = arith.constant 0 : i32
    %c0_i32_0 = arith.constant 0 : i32
    %c0_i32_1 = arith.constant 0 : i32
    return %c0_i32, %c0_i32_0 : i32, i32
  }
  func.func @transform_5(%arg0: i32) -> (i32, i32) {
    %c0_i32 = arith.constant 0 : i32
    %c0_i32_0 = arith.constant 0 : i32
    %c0_i32_1 = arith.constant 0 : i32
    return %c0_i32, %c0_i32_0 : i32, i32
  }
  func.func @transform_6(%arg0: i32) -> (i32, i32) {
    %c0_i32 = arith.constant 0 : i32
    %c0_i32_0 = arith.constant 0 : i32
    %c0_i32_1 = arith.constant 0 : i32
    return %c0_i32, %c0_i32_0 : i32, i32
  }
  func.func @transform_7(%arg0: i32) -> (i32, i32) {
    %c0_i32 = arith.constant 0 : i32
    %c0_i32_0 = arith.constant 0 : i32
    %c0_i32_1 = arith.constant 0 : i32
    return %c0_i32, %c0_i32_0 : i32, i32
  }
  func.func @transform_8(%arg0: i32) -> (i32, i32) {
    %c0_i32 = arith.constant 0 : i32
    %c0_i32_0 = arith.constant 0 : i32
    %c0_i32_1 = arith.constant 0 : i32
    return %c0_i32, %c0_i32_0 : i32, i32
  }
  func.func @transform_9(%arg0: i32) -> (i32, i32) {
    %c0_i32 = arith.constant 0 : i32
    %c0_i32_0 = arith.constant 0 : i32
    %c0_i32_1 = arith.constant 0 : i32
    return %c0_i32, %c0_i32_0 : i32, i32
  }
  func.func @transform_10(%arg0: i32) -> (i32, i32) {
    %c0_i32 = arith.constant 0 : i32
    %c0_i32_0 = arith.constant 0 : i32
    %c0_i32_1 = arith.constant 0 : i32
    return %c0_i32, %c0_i32_0 : i32, i32
  }
  func.func @transform_11(%arg0: i32) -> (i32, i32) {
    %c0_i32 = arith.constant 0 : i32
    %c0_i32_0 = arith.constant 0 : i32
    %c0_i32_1 = arith.constant 0 : i32
    return %c0_i32, %c0_i32_0 : i32, i32
  }
  func.func @transform_12(%arg0: i32) -> (i32, i32) {
    %c0_i32 = arith.constant 0 : i32
    %c0_i32_0 = arith.constant 0 : i32
    %c0_i32_1 = arith.constant 0 : i32
    return %c0_i32, %c0_i32_0 : i32, i32
  }
  func.func @transform_13(%arg0: i32) -> (i32, i32, i32) {
    %c0_i32 = arith.constant 0 : i32
    %c0_i32_0 = arith.constant 0 : i32
    %c0_i32_1 = arith.constant 0 : i32
    return %arg0, %c0_i32, %c0_i32_0 : i32, i32, i32
  }
}

</mosaic_0001>

<llo_original>
// kernel: tpu_custom_call.1
$region0: #{tpu_custom_call.1}
  #allocation0 [shape = 'u32[]', space=smem, size = 0x4, offset = 0x4, fixed_abs, tag = 'smem constant byte address 0x4 - core index']
  #allocation1 [shape = 'u32[144,128]{1,0:T(1,128)}', space=vmem, size = 0x12000, scoped, tag = 'internal scratch']
  %s0 = inlined_call_operand.hbm [shape: f32[2,8,32], index: 0, kind: input, shape index: {}]
  %s1 = inlined_call_operand.hbm [shape: f32[1,32], index: 1, kind: input, shape index: {}]
  %s2 = inlined_call_operand.hbm [shape: f32[1,32], index: 2, kind: input, shape index: {}]
  %s3 = inlined_call_operand.hbm [shape: f32[32,96], index: 3, kind: input, shape index: {}]
  %s4 = inlined_call_operand.hbm [shape: f32[1,96], index: 4, kind: input, shape index: {}]
  %s5 = inlined_call_operand.hbm [shape: f32[32,32], index: 5, kind: input, shape index: {}]
  %s6 = inlined_call_operand.hbm [shape: f32[1,32], index: 6, kind: input, shape index: {}]
  %s7 = inlined_call_operand.hbm [shape: f32[1,32], index: 7, kind: input, shape index: {}]
  %s8 = inlined_call_operand.hbm [shape: f32[1,32], index: 8, kind: input, shape index: {}]
  %s9 = inlined_call_operand.hbm [shape: f32[32,128], index: 9, kind: input, shape index: {}]
  %s10 = inlined_call_operand.hbm [shape: f32[1,128], index: 10, kind: input, shape index: {}]
  %s11 = inlined_call_operand.hbm [shape: f32[128,32], index: 11, kind: input, shape index: {}]
  %s12 = inlined_call_operand.hbm [shape: f32[1,32], index: 12, kind: input, shape index: {}]
  %s13 = inlined_call_operand.hbm [shape: f32[2,8,32], index: 13, kind: output, shape index: {}]
  %s14 = sld [smem:[#allocation0]]
  $region137: #{tpu_custom_call.1} parent=0
    _
  %s16 = ssub.s32 1, %s14
  %s17 = scalar_select 0, %s16, %s14
  $region1: #{tpu_custom_call.1} parent=0
    #allocation2 [shape = 'u8[8192]{0}', space=vmem, size = 0x2000, scoped, tag = 'input window, operand 0']
    #allocation3 [shape = 's32[2]{0}', space=sflag, size = 0x8, scoped, tag = 'scoped memory for tpu_custom_call.1']
    #allocation4 [shape = 's32[2]{0}', space=sflag, size = 0x8, scoped, tag = 'scoped memory for tpu_custom_call.1']
    #allocation5 [shape = 'u8[512]{0}', space=vmem, size = 0x400, scoped, tag = 'input window, operand 1, single buffered']
    #allocation6 [shape = 's32[1]{0}', space=sflag, size = 0x4, scoped, tag = 'scoped memory for tpu_custom_call.1']
    #allocation7 [shape = 'u8[512]{0}', space=vmem, size = 0x400, scoped, tag = 'input window, operand 2, single buffered']
    #allocation8 [shape = 'u8[16384]{0}', space=vmem, size = 0x4000, scoped, tag = 'input window, operand 3, single buffered']
    #allocation9 [shape = 's32[1]{0}', space=sflag, size = 0x4, scoped, tag = 'scoped memory for tpu_custom_call.1']
    #allocation10 [shape = 'u8[512]{0}', space=vmem, size = 0x400, scoped, tag = 'input window, operand 4, single buffered']
    #allocation11 [shape = 'u8[16384]{0}', space=vmem, size = 0x4000, scoped, tag = 'input window, operand 5, single buffered']
    #allocation12 [shape = 's32[1]{0}', space=sflag, size = 0x4, scoped, tag = 'scoped memory for tpu_custom_call.1']
    #allocation13 [shape = 'u8[512]{0}', space=vmem, size = 0x400, scoped, tag = 'input window, operand 6, single buffered']
    #allocation14 [shape = 'u8[512]{0}', space=vmem, size = 0x400, scoped, tag = 'input window, operand 7, single buffered']
    #allocation15 [shape = 's32[1]{0}', space=sflag, size = 0x4, scoped, tag = 'scoped memory for tpu_custom_call.1']
    #allocation16 [shape = 'u8[512]{0}', space=vmem, size = 0x400, scoped, tag = 'input window, operand 8, single buffered']
    #allocation17 [shape = 'u8[16384]{0}', space=vmem, size = 0x4000, scoped, tag = 'input window, operand 9, single buffered']
    #allocation18 [shape = 's32[1]{0}', space=sflag, size = 0x4, scoped, tag = 'scoped memory for tpu_custom_call.1']
    #allocation19 [shape = 'u8[512]{0}', space=vmem, size = 0x400, scoped, tag = 'input window, operand 10, single buffered']
    #allocation20 [shape = 'u8[65536]{0}', space=vmem, size = 0x10000, scoped, tag = 'input window, operand 11, single buffered']
    #allocation21 [shape = 's32[1]{0}', space=sflag, size = 0x4, scoped, tag = 'scoped memory for tpu_custom_call.1']
    #allocation22 [shape = 'u8[512]{0}', space=vmem, size = 0x400, scoped, tag = 'input window, operand 12, single buffered']
    #allocation23 [shape = 'u8[8192]{0}', space=vmem, size = 0x2000, scoped, tag = 'output window, operand 0']
    %18 = vsyncpa [#allocation3], 0
    %s19 = scalar_lea.sflag [#allocation3], 1
    %20 = vsyncpa %s19, 0
    %21 = vsyncpa [#allocation6], 0
    %22 = vsyncpa [#allocation9], 0
    %23 = vsyncpa [#allocation12], 0
    %24 = vsyncpa [#allocation15], 0
    %25 = vsyncpa [#allocation18], 0
    %26 = vsyncpa [#allocation21], 0
    %27 = vsyncpa [#allocation4], 0
    %s28 = scalar_lea.sflag [#allocation4], 1
    %29 = vsyncpa %s28, 0
    loop: start=0, step=1, limit=4
    $region2: #{tpu_custom_call.1} parent=1 // loop_pre_header
      _
    $region3: #{tpu_custom_call.1} parent=1 // loop_header
      %s31 = sphi 0, %s35
      %p32 = scmp.ge.s32.totalorder %s31, 4
      %s41 = sphi 0, %s43
      %s44 = sphi 0, %s41
      %s45 = sphi 0, %s44
      %s61 = sphi 0, %s45
      %s65 = sphi 0, %s65
      %s67 = sphi 0, %s65
      %s68 = sphi 0, %s67
      %s82 = sphi 0, %s68
      %s86 = sphi 0, %s86
      %s88 = sphi 0, %s86
      %s89 = sphi 0, %s88
      %s103 = sphi 0, %s89
      %s107 = sphi 0, %s107
      %s109 = sphi 0, %s107
      %s110 = sphi 0, %s109
      %s124 = sphi 0, %s110
      %s128 = sphi 0, %s128
      %s130 = sphi 0, %s128
      %s131 = sphi 0, %s130
      %s145 = sphi 0, %s131
      %s149 = sphi 0, %s149
      %s151 = sphi 0, %s149
      %s152 = sphi 0, %s151
      %s166 = sphi 0, %s152
      %s170 = sphi 0, %s170
      %s172 = sphi 0, %s170
      %s173 = sphi 0, %s172
      %s187 = sphi 0, %s173
      %s191 = sphi 0, %s191
      %s193 = sphi 0, %s191
      %s194 = sphi 0, %s193
      %s208 = sphi 0, %s194
      %s212 = sphi 0, %s212
      %s214 = sphi 0, %s212
      %s215 = sphi 0, %s214
      %s229 = sphi 0, %s215
      %s233 = sphi 0, %s233
      %s235 = sphi 0, %s233
      %s236 = sphi 0, %s235
      %s250 = sphi 0, %s236
      %s254 = sphi 0, %s254
      %s256 = sphi 0, %s254
      %s257 = sphi 0, %s256
      %s271 = sphi 0, %s257
      %s275 = sphi 0, %s275
      %s277 = sphi 0, %s275
      %s278 = sphi 0, %s277
      %s292 = sphi 0, %s278
      %s296 = sphi 0, %s296
      %s298 = sphi 0, %s296
      %s299 = sphi 0, %s298
      %s313 = sphi 0, %s299
      %s319 = sphi 0, %s321
      %s322 = sphi 0, %s319
      %s323 = sphi 0, %s322
      %s339 = sphi 0, %s323
    $region4: #{tpu_custom_call.1} parent=1 // loop_header_branch
      %34 = sbr.rel (%p32) target = $region8
    $region5: #{tpu_custom_call.1} parent=1 // loop_body
      %s36 = ssub.s32 %s31, 1
      %s37 = ssub.s32 %s31, 2
      %s38 = sadd.s32 %s31, 1
      %s39 = ssub.s32 %s31, %s38
      %p40 = scmp.eq.s32.totalorder %s39, 0
      %s42 = sadd.s32 %s41, 1
      %s43 = scalar_select %p40, %s41, %s42
      %p46 = pneg %p40
      %p47 = scmp.eq.s32.totalorder %s31, 1
      %p48 = por %p46, %p47
      %p49 = scmp.ne.s32.totalorder %s41, %s44
      %p50 = scmp.eq.s32.totalorder %s31, 0
      %p51 = por %p49, %p50
      %p52 = scmp.ne.s32.totalorder %s41, %s44
      %p53 = scmp.eq.s32.totalorder %s36, 1
      %p54 = por %p52, %p53
      %p55 = scmp.ne.s32.totalorder %s44, %s45
      %p56 = scmp.eq.s32.totalorder %s36, 0
      %p57 = por %p55, %p56
      %p58 = scmp.ne.s32.totalorder %s44, %s45
      %p59 = scmp.eq.s32.totalorder %s37, 1
      %p60 = por %p58, %p59
      %p62 = scmp.ne.s32.totalorder %s45, %s61
      %p63 = scmp.eq.s32.totalorder %s37, 0
      %p64 = por %p62, %p63
      %s66 = sadd.s32 %s65, 1
      %p69 = scmp.eq.s32.totalorder %s31, 1
      %p70 = scmp.ne.s32.totalorder %s65, %s67
      %p71 = scmp.eq.s32.totalorder %s31, 0
      %p72 = por %p70, %p71
      %p73 = scmp.ne.s32.totalorder %s65, %s67
      %p74 = scmp.eq.s32.totalorder %s36, 1
      %p75 = por %p73, %p74
      %p76 = scmp.ne.s32.totalorder %s67, %s68
      %p77 = scmp.eq.s32.totalorder %s36, 0
      %p78 = por %p76, %p77
      %p79 = scmp.ne.s32.totalorder %s67, %s68
      %p80 = scmp.eq.s32.totalorder %s37, 1
      %p81 = por %p79, %p80
      %p83 = scmp.ne.s32.totalorder %s68, %s82
      %p84 = scmp.eq.s32.totalorder %s37, 0
      %p85 = por %p83, %p84
      %s87 = sadd.s32 %s86, 1
      %p90 = scmp.eq.s32.totalorder %s31, 1
      %p91 = scmp.ne.s32.totalorder %s86, %s88
      %p92 = scmp.eq.s32.totalorder %s31, 0
      %p93 = por %p91, %p92
      %p94 = scmp.ne.s32.totalorder %s86, %s88
      %p95 = scmp.eq.s32.totalorder %s36, 1
      %p96 = por %p94, %p95
      %p97 = scmp.ne.s32.totalorder %s88, %s89
      %p98 = scmp.eq.s32.totalorder %s36, 0
      %p99 = por %p97, %p98
      %p100 = scmp.ne.s32.totalorder %s88, %s89
      %p101 = scmp.eq.s32.totalorder %s37, 1
      %p102 = por %p100, %p101
      %p104 = scmp.ne.s32.totalorder %s89, %s103
      %p105 = scmp.eq.s32.totalorder %s37, 0
      %p106 = por %p104, %p105
      %s108 = sadd.s32 %s107, 1
      %p111 = scmp.eq.s32.totalorder %s31, 1
      %p112 = scmp.ne.s32.totalorder %s107, %s109
      %p113 = scmp.eq.s32.totalorder %s31, 0
      %p114 = por %p112, %p113
      %p115 = scmp.ne.s32.totalorder %s107, %s109
      %p116 = scmp.eq.s32.totalorder %s36, 1
      %p117 = por %p115, %p116
      %p118 = scmp.ne.s32.totalorder %s109, %s110
      %p119 = scmp.eq.s32.totalorder %s36, 0
      %p120 = por %p118, %p119
      %p121 = scmp.ne.s32.totalorder %s109, %s110
      %p122 = scmp.eq.s32.totalorder %s37, 1
      %p123 = por %p121, %p122
      %p125 = scmp.ne.s32.totalorder %s110, %s124
      %p126 = scmp.eq.s32.totalorder %s37, 0
      %p127 = por %p125, %p126
      %s129 = sadd.s32 %s128, 1
      %p132 = scmp.eq.s32.totalorder %s31, 1
      %p133 = scmp.ne.s32.totalorder %s128, %s130
      %p134 = scmp.eq.s32.totalorder %s31, 0
      %p135 = por %p133, %p134
      %p136 = scmp.ne.s32.totalorder %s128, %s130
      %p137 = scmp.eq.s32.totalorder %s36, 1
      %p138 = por %p136, %p137
      %p139 = scmp.ne.s32.totalorder %s130, %s131
      %p140 = scmp.eq.s32.totalorder %s36, 0
      %p141 = por %p139, %p140
      %p142 = scmp.ne.s32.totalorder %s130, %s131
      %p143 = scmp.eq.s32.totalorder %s37, 1
      %p144 = por %p142, %p143
      %p146 = scmp.ne.s32.totalorder %s131, %s145
      %p147 = scmp.eq.s32.totalorder %s37, 0
      %p148 = por %p146, %p147
      %s150 = sadd.s32 %s149, 1
      %p153 = scmp.eq.s32.totalorder %s31, 1
      %p154 = scmp.ne.s32.totalorder %s149, %s151
      %p155 = scmp.eq.s32.totalorder %s31, 0
      %p156 = por %p154, %p155
      %p157 = scmp.ne.s32.totalorder %s149, %s151
      %p158 = scmp.eq.s32.totalorder %s36, 1
      %p159 = por %p157, %p158
      %p160 = scmp.ne.s32.totalorder %s151, %s152
      %p161 = scmp.eq.s32.totalorder %s36, 0
      %p162 = por %p160, %p161
      %p163 = scmp.ne.s32.totalorder %s151, %s152
      %p164 = scmp.eq.s32.totalorder %s37, 1
      %p165 = por %p163, %p164
      %p167 = scmp.ne.s32.totalorder %s152, %s166
      %p168 = scmp.eq.s32.totalorder %s37, 0
      %p169 = por %p167, %p168
      %s171 = sadd.s32 %s170, 1
      %p174 = scmp.eq.s32.totalorder %s31, 1
      %p175 = scmp.ne.s32.totalorder %s170, %s172
      %p176 = scmp.eq.s32.totalorder %s31, 0
      %p177 = por %p175, %p176
      %p178 = scmp.ne.s32.totalorder %s170, %s172
      %p179 = scmp.eq.s32.totalorder %s36, 1
      %p180 = por %p178, %p179
      %p181 = scmp.ne.s32.totalorder %s172, %s173
      %p182 = scmp.eq.s32.totalorder %s36, 0
      %p183 = por %p181, %p182
      %p184 = scmp.ne.s32.totalorder %s172, %s173
      %p185 = scmp.eq.s32.totalorder %s37, 1
      %p186 = por %p184, %p185
      %p188 = scmp.ne.s32.totalorder %s173, %s187
      %p189 = scmp.eq.s32.totalorder %s37, 0
      %p190 = por %p188, %p189
      %s192 = sadd.s32 %s191, 1
      %p195 = scmp.eq.s32.totalorder %s31, 1
      %p196 = scmp.ne.s32.totalorder %s191, %s193
      %p197 = scmp.eq.s32.totalorder %s31, 0
      %p198 = por %p196, %p197
      %p199 = scmp.ne.s32.totalorder %s191, %s193
      %p200 = scmp.eq.s32.totalorder %s36, 1
      %p201 = por %p199, %p200
      %p202 = scmp.ne.s32.totalorder %s193, %s194
      %p203 = scmp.eq.s32.totalorder %s36, 0
      %p204 = por %p202, %p203
      %p205 = scmp.ne.s32.totalorder %s193, %s194
      %p206 = scmp.eq.s32.totalorder %s37, 1
      %p207 = por %p205, %p206
      %p209 = scmp.ne.s32.totalorder %s194, %s208
      %p210 = scmp.eq.s32.totalorder %s37, 0
      %p211 = por %p209, %p210
      %s213 = sadd.s32 %s212, 1
      %p216 = scmp.eq.s32.totalorder %s31, 1
      %p217 = scmp.ne.s32.totalorder %s212, %s214
      %p218 = scmp.eq.s32.totalorder %s31, 0
      %p219 = por %p217, %p218
      %p220 = scmp.ne.s32.totalorder %s212, %s214
      %p221 = scmp.eq.s32.totalorder %s36, 1
      %p222 = por %p220, %p221
      %p223 = scmp.ne.s32.totalorder %s214, %s215
      %p224 = scmp.eq.s32.totalorder %s36, 0
      %p225 = por %p223, %p224
      %p226 = scmp.ne.s32.totalorder %s214, %s215
      %p227 = scmp.eq.s32.totalorder %s37, 1
      %p228 = por %p226, %p227
      %p230 = scmp.ne.s32.totalorder %s215, %s229
      %p231 = scmp.eq.s32.totalorder %s37, 0
      %p232 = por %p230, %p231
      %s234 = sadd.s32 %s233, 1
      %p237 = scmp.eq.s32.totalorder %s31, 1
      %p238 = scmp.ne.s32.totalorder %s233, %s235
      %p239 = scmp.eq.s32.totalorder %s31, 0
      %p240 = por %p238, %p239
      %p241 = scmp.ne.s32.totalorder %s233, %s235
      %p242 = scmp.eq.s32.totalorder %s36, 1
      %p243 = por %p241, %p242
      %p244 = scmp.ne.s32.totalorder %s235, %s236
      %p245 = scmp.eq.s32.totalorder %s36, 0
      %p246 = por %p244, %p245
      %p247 = scmp.ne.s32.totalorder %s235, %s236
      %p248 = scmp.eq.s32.totalorder %s37, 1
      %p249 = por %p247, %p248
      %p251 = scmp.ne.s32.totalorder %s236, %s250
      %p252 = scmp.eq.s32.totalorder %s37, 0
      %p253 = por %p251, %p252
      %s255 = sadd.s32 %s254, 1
      %p258 = scmp.eq.s32.totalorder %s31, 1
      %p259 = scmp.ne.s32.totalorder %s254, %s256
      %p260 = scmp.eq.s32.totalorder %s31, 0
      %p261 = por %p259, %p260
      %p262 = scmp.ne.s32.totalorder %s254, %s256
      %p263 = scmp.eq.s32.totalorder %s36, 1
      %p264 = por %p262, %p263
      %p265 = scmp.ne.s32.totalorder %s256, %s257
      %p266 = scmp.eq.s32.totalorder %s36, 0
      %p267 = por %p265, %p266
      %p268 = scmp.ne.s32.totalorder %s256, %s257
      %p269 = scmp.eq.s32.totalorder %s37, 1
      %p270 = por %p268, %p269
      %p272 = scmp.ne.s32.totalorder %s257, %s271
      %p273 = scmp.eq.s32.totalorder %s37, 0
      %p274 = por %p272, %p273
      %s276 = sadd.s32 %s275, 1
      %p279 = scmp.eq.s32.totalorder %s31, 1
      %p280 = scmp.ne.s32.totalorder %s275, %s277
      %p281 = scmp.eq.s32.totalorder %s31, 0
      %p282 = por %p280, %p281
      %p283 = scmp.ne.s32.totalorder %s275, %s277
      %p284 = scmp.eq.s32.totalorder %s36, 1
      %p285 = por %p283, %p284
      %p286 = scmp.ne.s32.totalorder %s277, %s278
      %p287 = scmp.eq.s32.totalorder %s36, 0
      %p288 = por %p286, %p287
      %p289 = scmp.ne.s32.totalorder %s277, %s278
      %p290 = scmp.eq.s32.totalorder %s37, 1
      %p291 = por %p289, %p290
      %p293 = scmp.ne.s32.totalorder %s278, %s292
      %p294 = scmp.eq.s32.totalorder %s37, 0
      %p295 = por %p293, %p294
      %s297 = sadd.s32 %s296, 1
      %p300 = scmp.eq.s32.totalorder %s31, 1
      %p301 = scmp.ne.s32.totalorder %s296, %s298
      %p302 = scmp.eq.s32.totalorder %s31, 0
      %p303 = por %p301, %p302
      %p304 = scmp.ne.s32.totalorder %s296, %s298
      %p305 = scmp.eq.s32.totalorder %s36, 1
      %p306 = por %p304, %p305
      %p307 = scmp.ne.s32.totalorder %s298, %s299
      %p308 = scmp.eq.s32.totalorder %s36, 0
      %p309 = por %p307, %p308
      %p310 = scmp.ne.s32.totalorder %s298, %s299
      %p311 = scmp.eq.s32.totalorder %s37, 1
      %p312 = por %p310, %p311
      %p314 = scmp.ne.s32.totalorder %s299, %s313
      %p315 = scmp.eq.s32.totalorder %s37, 0
      %p316 = por %p314, %p315
      %s317 = ssub.s32 %s31, %s38
      %p318 = scmp.eq.s32.totalorder %s317, 0
      %s320 = sadd.s32 %s319, 1
      %s321 = scalar_select %p318, %s319, %s320
      %p324 = pneg %p318
      %p325 = scmp.eq.s32.totalorder %s31, 1
      %p326 = por %p324, %p325
      %p327 = scmp.ne.s32.totalorder %s319, %s322
      %p328 = scmp.eq.s32.totalorder %s31, 0
      %p329 = por %p327, %p328
      %p330 = scmp.ne.s32.totalorder %s319, %s322
      %p331 = scmp.eq.s32.totalorder %s36, 1
      %p332 = por %p330, %p331
      %p333 = scmp.ne.s32.totalorder %s322, %s323
      %p334 = scmp.eq.s32.totalorder %s36, 0
      %p335 = por %p333, %p334
      %p336 = scmp.ne.s32.totalorder %s322, %s323
      %p337 = scmp.eq.s32.totalorder %s37, 1
      %p338 = por %p336, %p337
      %p340 = scmp.ne.s32.totalorder %s323, %s339
      %p341 = scmp.eq.s32.totalorder %s37, 0
      %p342 = por %p340, %p341
      %p343 = scmp.le.s32.totalorder 1, %s31
      %p344 = scmp.lt.s32.totalorder %s31, 3
      %p345 = pnand %p343, %p344
      %p346 = pneg %p345
      // Predicated region
      $region9: #{tpu_custom_call.1} parent=5 // pred_check
        _
      $region10: #{tpu_custom_call.1} parent=5 // pred_check_branch
        %348 = sbr.rel (%p345) target = $region12
      $region11: #{tpu_custom_call.1} parent=5 // pred_region
        %s349 = ssub.s32 %s31, 1
        // Predicated region
        $region13: #{tpu_custom_call.1} parent=11 // pred_check
          %p350 = pneg %p78
        $region14: #{tpu_custom_call.1} parent=11 // pred_check_branch
          %352 = sbr.rel (%p350) target = $region16
        $region15: #{tpu_custom_call.1} parent=11 // pred_region
          %s354 = ssub.s32 16, 16
          %355 = vsyncadd [#allocation6], %s354
          %s357 = sshll.u32 [#allocation5], 4
          %s358 = int_to_ptr.vmem [resolvable:$true] %s357
          %360 = dma.hbm_to_vmem [thread:$0]  %s1, 16, %s358, [#allocation6]
        $region16: #{tpu_custom_call.1} parent=11 // pred_fallthru
          _
        // Predicated region
        $region17: #{tpu_custom_call.1} parent=11 // pred_check
          %p361 = pneg %p99
        $region18: #{tpu_custom_call.1} parent=11 // pred_check_branch
          %363 = sbr.rel (%p361) target = $region20
        $region19: #{tpu_custom_call.1} parent=11 // pred_region
          %s365 = ssub.s32 16, 16
          %366 = vsyncadd [#allocation6], %s365
          %s368 = sshll.u32 [#allocation7], 4
          %s369 = int_to_ptr.vmem [resolvable:$true] %s368
          %371 = dma.hbm_to_vmem [thread:$0]  %s2, 16, %s369, [#allocation6]
        $region20: #{tpu_custom_call.1} parent=11 // pred_fallthru
          _
        // Predicated region
        $region21: #{tpu_custom_call.1} parent=11 // pred_check
          %p372 = pneg %p120
        $region22: #{tpu_custom_call.1} parent=11 // pred_check_branch
          %374 = sbr.rel (%p372) target = $region24
        $region23: #{tpu_custom_call.1} parent=11 // pred_region
          %s376 = ssub.s32 512, 512
          %377 = vsyncadd [#allocation9], %s376
          %s378 = sshll.u32 [#allocation8], 4
          %s379 = int_to_ptr.vmem [resolvable:$true] %s378
          %384 = dma.hbm_to_vmem [thread:$0]  %s3, 512, %s379, [#allocation9], 128, 128, 8
        $region24: #{tpu_custom_call.1} parent=11 // pred_fallthru
          _
        // Predicated region
        $region25: #{tpu_custom_call.1} parent=11 // pred_check
          %p385 = pneg %p141
        $region26: #{tpu_custom_call.1} parent=11 // pred_check_branch
          %387 = sbr.rel (%p385) target = $region28
        $region27: #{tpu_custom_call.1} parent=11 // pred_region
          %s389 = ssub.s32 16, 16
          %390 = vsyncadd [#allocation9], %s389
          %s392 = sshll.u32 [#allocation10], 4
          %s393 = int_to_ptr.vmem [resolvable:$true] %s392
          %395 = dma.hbm_to_vmem [thread:$0]  %s4, 16, %s393, [#allocation9]
        $region28: #{tpu_custom_call.1} parent=11 // pred_fallthru
          _
        // Predicated region
        $region29: #{tpu_custom_call.1} parent=11 // pred_check
          %p396 = pneg %p162
        $region30: #{tpu_custom_call.1} parent=11 // pred_check_branch
          %398 = sbr.rel (%p396) target = $region32
        $region31: #{tpu_custom_call.1} parent=11 // pred_region
          %s400 = ssub.s32 512, 512
          %401 = vsyncadd [#allocation12], %s400
          %s402 = sshll.u32 [#allocation11], 4
          %s403 = int_to_ptr.vmem [resolvable:$true] %s402
          %408 = dma.hbm_to_vmem [thread:$0]  %s5, 512, %s403, [#allocation12], 128, 128, 8
        $region32: #{tpu_custom_call.1} parent=11 // pred_fallthru
          _
        // Predicated region
        $region33: #{tpu_custom_call.1} parent=11 // pred_check
          %p409 = pneg %p183
        $region34: #{tpu_custom_call.1} parent=11 // pred_check_branch
          %411 = sbr.rel (%p409) target = $region36
        $region35: #{tpu_custom_call.1} parent=11 // pred_region
          %s413 = ssub.s32 16, 16
          %414 = vsyncadd [#allocation12], %s413
          %s416 = sshll.u32 [#allocation13], 4
          %s417 = int_to_ptr.vmem [resolvable:$true] %s416
          %419 = dma.hbm_to_vmem [thread:$0]  %s6, 16, %s417, [#allocation12]
        $region36: #{tpu_custom_call.1} parent=11 // pred_fallthru
          _
        // Predicated region
        $region37: #{tpu_custom_call.1} parent=11 // pred_check
          %p420 = pneg %p204
        $region38: #{tpu_custom_call.1} parent=11 // pred_check_branch
          %422 = sbr.rel (%p420) target = $region40
        $region39: #{tpu_custom_call.1} parent=11 // pred_region
          %s424 = ssub.s32 16, 16
          %425 = vsyncadd [#allocation15], %s424
          %s427 = sshll.u32 [#allocation14], 4
          %s428 = int_to_ptr.vmem [resolvable:$true] %s427
          %430 = dma.hbm_to_vmem [thread:$0]  %s7, 16, %s428, [#allocation15]
        $region40: #{tpu_custom_call.1} parent=11 // pred_fallthru
          _
        // Predicated region
        $region41: #{tpu_custom_call.1} parent=11 // pred_check
          %p431 = pneg %p225
        $region42: #{tpu_custom_call.1} parent=11 // pred_check_branch
          %433 = sbr.rel (%p431) target = $region44
        $region43: #{tpu_custom_call.1} parent=11 // pred_region
          %s435 = ssub.s32 16, 16
          %436 = vsyncadd [#allocation15], %s435
          %s438 = sshll.u32 [#allocation16], 4
          %s439 = int_to_ptr.vmem [resolvable:$true] %s438
          %441 = dma.hbm_to_vmem [thread:$0]  %s8, 16, %s439, [#allocation15]
        $region44: #{tpu_custom_call.1} parent=11 // pred_fallthru
          _
        // Predicated region
        $region45: #{tpu_custom_call.1} parent=11 // pred_check
          %p442 = pneg %p246
        $region46: #{tpu_custom_call.1} parent=11 // pred_check_branch
          %444 = sbr.rel (%p442) target = $region48
        $region47: #{tpu_custom_call.1} parent=11 // pred_region
          %s446 = ssub.s32 512, 512
          %447 = vsyncadd [#allocation18], %s446
          %s448 = sshll.u32 [#allocation17], 4
          %s449 = int_to_ptr.vmem [resolvable:$true] %s448
          %454 = dma.hbm_to_vmem [thread:$0]  %s9, 512, %s449, [#allocation18], 128, 128, 8
        $region48: #{tpu_custom_call.1} parent=11 // pred_fallthru
          _
        // Predicated region
        $region49: #{tpu_custom_call.1} parent=11 // pred_check
          %p455 = pneg %p267
        $region50: #{tpu_custom_call.1} parent=11 // pred_check_branch
          %457 = sbr.rel (%p455) target = $region52
        $region51: #{tpu_custom_call.1} parent=11 // pred_region
          %s459 = ssub.s32 16, 16
          %460 = vsyncadd [#allocation18], %s459
          %s462 = sshll.u32 [#allocation19], 4
          %s463 = int_to_ptr.vmem [resolvable:$true] %s462
          %465 = dma.hbm_to_vmem [thread:$0]  %s10, 16, %s463, [#allocation18]
        $region52: #{tpu_custom_call.1} parent=11 // pred_fallthru
          _
        // Predicated region
        $region53: #{tpu_custom_call.1} parent=11 // pred_check
          %p466 = pneg %p288
        $region54: #{tpu_custom_call.1} parent=11 // pred_check_branch
          %468 = sbr.rel (%p466) target = $region56
        $region55: #{tpu_custom_call.1} parent=11 // pred_region
          %s470 = ssub.s32 2048, 2048
          %471 = vsyncadd [#allocation21], %s470
          %s472 = sshll.u32 [#allocation20], 4
          %s473 = int_to_ptr.vmem [resolvable:$true] %s472
          %478 = dma.hbm_to_vmem [thread:$0]  %s11, 2048, %s473, [#allocation21], 128, 128, 8
        $region56: #{tpu_custom_call.1} parent=11 // pred_fallthru
          _
        // Predicated region
        $region57: #{tpu_custom_call.1} parent=11 // pred_check
          %p479 = pneg %p309
        $region58: #{tpu_custom_call.1} parent=11 // pred_check_branch
          %481 = sbr.rel (%p479) target = $region60
        $region59: #{tpu_custom_call.1} parent=11 // pred_region
          %s483 = ssub.s32 16, 16
          %484 = vsyncadd [#allocation21], %s483
          %s486 = sshll.u32 [#allocation22], 4
          %s487 = int_to_ptr.vmem [resolvable:$true] %s486
          %489 = dma.hbm_to_vmem [thread:$0]  %s12, 16, %s487, [#allocation21]
        $region60: #{tpu_custom_call.1} parent=11 // pred_fallthru
          _
      $region12: #{tpu_custom_call.1} parent=5 // pred_fallthru
        _
      %p490 = scmp.lt.s32.totalorder %s31, 2
      // Predicated region
      $region61: #{tpu_custom_call.1} parent=5 // pred_check
        %p491 = pneg %p490
      $region62: #{tpu_custom_call.1} parent=5 // pred_check_branch
        %493 = sbr.rel (%p491) target = $region64
      $region63: #{tpu_custom_call.1} parent=5 // pred_region
        // Predicated region
        $region65: #{tpu_custom_call.1} parent=63 // pred_check
          %p494 = pneg %p51
        $region66: #{tpu_custom_call.1} parent=63 // pred_check_branch
          %496 = sbr.rel (%p494) target = $region68
        $region67: #{tpu_custom_call.1} parent=63 // pred_region
          %s497 = sand.u32 %s41, 1
          %s498 = scalar_lea.sflag [#allocation3], %s497
          %s499 = sand.u32 %s41, 1
          %s500 = smul.addr %s499, 8
          %s501 = scalar_lea.vmem [#allocation2], %s500
          %s503 = ssub.s32 128, 128
          %504 = vsyncadd %s498, %s503
          %s505 = smul.addr %s31, 128
          %s506 = scalar_lea.hbm %s0, %s505
          %s508 = sshll.u32 %s501, 4
          %s509 = int_to_ptr.vmem [resolvable:$true] %s508
          %511 = dma.hbm_to_vmem [thread:$0]  %s506, 128, %s509, %s498
        $region68: #{tpu_custom_call.1} parent=63 // pred_fallthru
          _
      $region64: #{tpu_custom_call.1} parent=5 // pred_fallthru
        _
      %p512 = scmp.le.s32.totalorder 1, %s31
      %p513 = scmp.lt.s32.totalorder %s31, 3
      %p514 = pnand %p512, %p513
      %p515 = pneg %p514
      // Predicated region
      $region69: #{tpu_custom_call.1} parent=5 // pred_check
        _
      $region70: #{tpu_custom_call.1} parent=5 // pred_check_branch
        %517 = sbr.rel (%p514) target = $region72
      $region71: #{tpu_custom_call.1} parent=5 // pred_region
        %s518 = ssub.s32 %s31, 1
        %s519 = sand.u32 %s44, 1
        %s520 = scalar_lea.sflag [#allocation3], %s519
        %s521 = sand.u32 %s44, 1
        %s522 = smul.addr %s521, 8
        %s523 = scalar_lea.vmem [#allocation2], %s522
        // Predicated region
        $region73: #{tpu_custom_call.1} parent=71 // pred_check
          %p524 = pneg %p57
        $region74: #{tpu_custom_call.1} parent=71 // pred_check_branch
          %526 = sbr.rel (%p524) target = $region76
        $region75: #{tpu_custom_call.1} parent=71 // pred_region
          %527 = dma.done %s520, 128
        $region76: #{tpu_custom_call.1} parent=71 // pred_fallthru
          _
        // Predicated region
        $region77: #{tpu_custom_call.1} parent=71 // pred_check
          %p528 = pneg %p78
        $region78: #{tpu_custom_call.1} parent=71 // pred_check_branch
          %530 = sbr.rel (%p528) target = $region80
        $region79: #{tpu_custom_call.1} parent=71 // pred_region
          %531 = dma.done [#allocation6], 16
        $region80: #{tpu_custom_call.1} parent=71 // pred_fallthru
          _
        // Predicated region
        $region81: #{tpu_custom_call.1} parent=71 // pred_check
          %p532 = pneg %p99
        $region82: #{tpu_custom_call.1} parent=71 // pred_check_branch
          %534 = sbr.rel (%p532) target = $region84
        $region83: #{tpu_custom_call.1} parent=71 // pred_region
          %535 = dma.done [#allocation6], 16
        $region84: #{tpu_custom_call.1} parent=71 // pred_fallthru
          _
        // Predicated region
        $region85: #{tpu_custom_call.1} parent=71 // pred_check
          %p536 = pneg %p120
        $region86: #{tpu_custom_call.1} parent=71 // pred_check_branch
          %538 = sbr.rel (%p536) target = $region88
        $region87: #{tpu_custom_call.1} parent=71 // pred_region
          %539 = dma.done [#allocation9], 512
        $region88: #{tpu_custom_call.1} parent=71 // pred_fallthru
          _
        // Predicated region
        $region89: #{tpu_custom_call.1} parent=71 // pred_check
          %p540 = pneg %p141
        $region90: #{tpu_custom_call.1} parent=71 // pred_check_branch
          %542 = sbr.rel (%p540) target = $region92
        $region91: #{tpu_custom_call.1} parent=71 // pred_region
          %543 = dma.done [#allocation9], 16
        $region92: #{tpu_custom_call.1} parent=71 // pred_fallthru
          _
        // Predicated region
        $region93: #{tpu_custom_call.1} parent=71 // pred_check
          %p544 = pneg %p162
        $region94: #{tpu_custom_call.1} parent=71 // pred_check_branch
          %546 = sbr.rel (%p544) target = $region96
        $region95: #{tpu_custom_call.1} parent=71 // pred_region
          %547 = dma.done [#allocation12], 512
        $region96: #{tpu_custom_call.1} parent=71 // pred_fallthru
          _
        // Predicated region
        $region97: #{tpu_custom_call.1} parent=71 // pred_check
          %p548 = pneg %p183
        $region98: #{tpu_custom_call.1} parent=71 // pred_check_branch
          %550 = sbr.rel (%p548) target = $region100
        $region99: #{tpu_custom_call.1} parent=71 // pred_region
          %551 = dma.done [#allocation12], 16
        $region100: #{tpu_custom_call.1} parent=71 // pred_fallthru
          _
        // Predicated region
        $region101: #{tpu_custom_call.1} parent=71 // pred_check
          %p552 = pneg %p204
        $region102: #{tpu_custom_call.1} parent=71 // pred_check_branch
          %554 = sbr.rel (%p552) target = $region104
        $region103: #{tpu_custom_call.1} parent=71 // pred_region
          %555 = dma.done [#allocation15], 16
        $region104: #{tpu_custom_call.1} parent=71 // pred_fallthru
          _
        // Predicated region
        $region105: #{tpu_custom_call.1} parent=71 // pred_check
          %p556 = pneg %p225
        $region106: #{tpu_custom_call.1} parent=71 // pred_check_branch
          %558 = sbr.rel (%p556) target = $region108
        $region107: #{tpu_custom_call.1} parent=71 // pred_region
          %559 = dma.done [#allocation15], 16
        $region108: #{tpu_custom_call.1} parent=71 // pred_fallthru
          _
        // Predicated region
        $region109: #{tpu_custom_call.1} parent=71 // pred_check
          %p560 = pneg %p246
        $region110: #{tpu_custom_call.1} parent=71 // pred_check_branch
          %562 = sbr.rel (%p560) target = $region112
        $region111: #{tpu_custom_call.1} parent=71 // pred_region
          %563 = dma.done [#allocation18], 512
        $region112: #{tpu_custom_call.1} parent=71 // pred_fallthru
          _
        // Predicated region
        $region113: #{tpu_custom_call.1} parent=71 // pred_check
          %p564 = pneg %p267
        $region114: #{tpu_custom_call.1} parent=71 // pred_check_branch
          %566 = sbr.rel (%p564) target = $region116
        $region115: #{tpu_custom_call.1} parent=71 // pred_region
          %567 = dma.done [#allocation18], 16
        $region116: #{tpu_custom_call.1} parent=71 // pred_fallthru
          _
        // Predicated region
        $region117: #{tpu_custom_call.1} parent=71 // pred_check
          %p568 = pneg %p288
        $region118: #{tpu_custom_call.1} parent=71 // pred_check_branch
          %570 = sbr.rel (%p568) target = $region120
        $region119: #{tpu_custom_call.1} parent=71 // pred_region
          %571 = dma.done [#allocation21], 2048
        $region120: #{tpu_custom_call.1} parent=71 // pred_fallthru
          _
        // Predicated region
        $region121: #{tpu_custom_call.1} parent=71 // pred_check
          %p572 = pneg %p309
        $region122: #{tpu_custom_call.1} parent=71 // pred_check_branch
          %574 = sbr.rel (%p572) target = $region124
        $region123: #{tpu_custom_call.1} parent=71 // pred_region
          %575 = dma.done [#allocation21], 16
        $region124: #{tpu_custom_call.1} parent=71 // pred_fallthru
          _
        %s576 = sand.u32 %s44, 1
        %s577 = scalar_lea.sflag [#allocation3], %s576
        %s578 = sand.u32 %s44, 1
        %s579 = smul.addr %s578, 8
        %s580 = scalar_lea.vmem [#allocation2], %s579
        %p581 = pneg %p57
        %p582 = pneg %p54
        %p583 = pneg %p78
        %p584 = pneg %p75
        %p585 = pneg %p99
        %p586 = pneg %p96
        %p587 = pneg %p120
        %p588 = pneg %p117
        %p589 = pneg %p141
        %p590 = pneg %p138
        %p591 = pneg %p162
        %p592 = pneg %p159
        %p593 = pneg %p183
        %p594 = pneg %p180
        %p595 = pneg %p204
        %p596 = pneg %p201
        %p597 = pneg %p225
        %p598 = pneg %p222
        %p599 = pneg %p246
        %p600 = pneg %p243
        %p601 = pneg %p267
        %p602 = pneg %p264
        %p603 = pneg %p288
        %p604 = pneg %p285
        %p605 = pneg %p309
        %p606 = pneg %p306
        %p607 = pneg %p335
        %p608 = pneg %p332
        %s609 = sand.u32 %s322, 1
        %s610 = scalar_lea.sflag [#allocation4], %s609
        %s611 = sand.u32 %s322, 1
        %s612 = smul.addr %s611, 8
        %s613 = scalar_lea.vmem [#allocation23], %s612
        %v614 = vld [vmem:[%s523] sm:$0xff]
        %v615 = vld [vmem:[#allocation5] sm:$0x1]
        %v616 = vld [vmem:[#allocation7] sm:$0x1]
        %vm617 = vcmask 261120
        %v618 = vsel %vm617, %v614, 0.0
        %619 = vadd.xlane.f32.xlu0 %v618
        %v620 = vpop.xlane.xlu0 %619
        %v621 = vrcp.pop 32.0
        %v622 = vmul.f32 %v620, %v621
        %v623 = vsub.f32 %v614, %v622
        %v624 = vmul.f32 %v623, %v623
        %v625 = vsel %vm617, %v624, 0.0
        %626 = vadd.xlane.f32.xlu0 %v625
        %v627 = vpop.xlane.xlu0 %626
        %v628 = vmul.f32 %v627, %v621
        %v629 = vadd.f32 %v628, 1e-05
        %v630 = vrsqrt.pop %v629
        %v631 = vmul.f32 %v623, %v630
        %v633 = vlaneseq
        %v634 = vshrl.u32 %v633, 7
        %v635 = vsub.s32 0, %v634
        %v636 = vrot.slane %v615, %v635
        %v638 = vmul.f32 %v631, %v636
        %v640 = vlaneseq
        %v641 = vshrl.u32 %v640, 7
        %v642 = vsub.s32 0, %v641
        %v643 = vrot.slane %v616, %v642
        %v645 = vadd.f32 %v638, %v643
        %v646 = vld [vmem:[#allocation8] sm:$0xff]
        %v647 = vld [vmem:[#allocation8 + $0x8] sm:$0xff]
        %v648 = vld [vmem:[#allocation8 + $0x10] sm:$0xff]
        %v649 = vld [vmem:[#allocation8 + $0x18] sm:$0xff]
        %v650 = vld [vmem:[#allocation10] sm:$0x1]
        %v652 = vlaneseq
        %v653 = vshrl.u32 %v652, 7
        %v654 = vsub.s32 0, %v653
        %v655 = vrot.slane %v650, %v654
        %v658 = vsel %vm617, %v645, 0
        %660 = vmatprep.subr.mxu0 0.0
        %661 = vmatpush1.msra.mxu0 %v646
        %662 = vmatprep.subr.mxu0 0.0
        %663 = vmatpush1.msra.mxu0 %v647
        %664 = vmatprep.subr.mxu0 0.0
        %665 = vmatpush1.msra.mxu0 %v648
        %666 = vmatprep.subr.mxu0 0.0
        %667 = vmatpush1.msra.mxu0 %v649
        %668 = vmatprep.subr.mxu0 0.0
        %669 = vmatpush1.msra.mxu0 0.0
        %670 = vmatprep.subr.mxu0 0.0
        %671 = vmatpush1.msra.mxu0 0.0
        %672 = vmatprep.subr.mxu0 0.0
        %673 = vmatpush1.msra.mxu0 0.0
        %674 = vmatprep.subr.mxu0 0.0
        %675 = vmatpush1.msra.mxu0 0.0
        %676 = vmatprep.subr.mxu0 0.0
        %677 = vmatpush1.msra.mxu0 0.0
        %678 = vmatprep.subr.mxu0 0.0
        %679 = vmatpush1.msra.mxu0 0.0
        %680 = vmatprep.subr.mxu0 0.0
        %681 = vmatpush1.msra.mxu0 0.0
        %682 = vmatprep.subr.mxu0 0.0
        %683 = vmatpush1.msra.mxu0 0.0
        %684 = vmatprep.subr.mxu0 0.0
        %685 = vmatpush1.msra.mxu0 0.0
        %686 = vmatprep.subr.mxu0 0.0
        %687 = vmatpush1.msra.mxu0 0.0
        %688 = vmatprep.subr.mxu0 0.0
        %689 = vmatpush1.msra.mxu0 0.0
        %690 = vmatprep.subr.mxu0 0.0
        %691 = vmatpush1.msra.mxu0 0.0
        %692 = vmatprep.subr.mxu0 0.0
        %693 = vmatpush1.msra.mxu0 0.0
        %694 = vmatprep.subr.mxu0 0.0
        %695 = vmatpush1.msra.mxu0 0.0
        %696 = vmatprep.subr.mxu0 0.0
        %697 = vmatpush1.msra.mxu0 0.0
        %698 = vmatprep.subr.mxu0 0.0
        %699 = vmatpush1.msra.mxu0 0.0
        %700 = vmatprep.subr.mxu0 0.0
        %701 = vmatpush1.msra.mxu0 0.0
        %702 = vmatprep.subr.mxu0 0.0
        %703 = vmatpush1.msra.mxu0 0.0
        %704 = vmatprep.subr.mxu0 0.0
        %705 = vmatpush1.msra.mxu0 0.0
        %706 = vmatprep.subr.mxu0 0.0
        %707 = vmatpush1.msra.mxu0 0.0
        %708 = vmatprep.subr.mxu0 0.0
        %709 = vmatpush1.msra.mxu0 0.0
        %710 = vmatprep.subr.mxu0 0.0
        %711 = vmatpush1.msra.mxu0 0.0
        %712 = vmatprep.subr.mxu0 0.0
        %713 = vmatpush1.msra.mxu0 0.0
        %714 = vmatprep.subr.mxu0 0.0
        %715 = vmatpush1.msra.mxu0 0.0
        %716 = vmatprep.subr.mxu0 0.0
        %717 = vmatpush1.msra.mxu0 0.0
        %718 = vmatprep.subr.mxu0 0.0
        %719 = vmatpush1.msra.mxu0 0.0
        %720 = vmatprep.subr.mxu0 0.0
        %721 = vmatpush1.msra.mxu0 0.0
        %722 = vmatprep.subr.mxu0 0.0
        %723 = vmatpush1.msra.mxu0 0.0
        %724 = vmatprep.mubr.f32.mxu0 0.0
        %725 = vmatmul.mubr.f32.gmra.mrb[0].mxu0 %v658
        %v726 = vpop.f32.mrb[0].mxu0
        %v727 = vadd.f32 %v655, %v726
        %v728 = vpop.f32.mrb[0].mxu0
        %729 = vdwg.mxu0
        %v730 = vld [vmem:[#allocation13] sm:$0x1]
        %v732 = vlaneseq
        %v733 = vshrl.u32 %v732, 7
        %v734 = vsub.s32 0, %v733
        %v735 = vrot.slane %v730, %v734
        %v737 = vadd.f32 %v614, %v735
        %v738 = vmul.f32 %v727, 0.35355338
        %740 = vrot.lane.b32.xlu0 %v727, 96
        %v741 = vpop.permute.xlu0 %740
        %vm742 = vcmask 64512
        %v744 = vsel %vm742, %v738, 0
        %v746 = vsel %vm742, %v741, 0
        %748 = vmatprep.subr.mxu0 0.0
        %749 = vmatpush1.xpose.msra.mxu0 %v746
        %750 = vmatprep.subr.mxu0 0.0
        %751 = vmatpush1.xpose.msra.mxu0 0.0
        %752 = vmatprep.subr.mxu0 0.0
        %753 = vmatpush1.xpose.msra.mxu0 0.0
        %754 = vmatprep.subr.mxu0 0.0
        %755 = vmatpush1.xpose.msra.mxu0 0.0
        %756 = vmatprep.subr.mxu0 0.0
        %757 = vmatpush1.xpose.msra.mxu0 0.0
        %758 = vmatprep.subr.mxu0 0.0
        %759 = vmatpush1.xpose.msra.mxu0 0.0
        %760 = vmatprep.subr.mxu0 0.0
        %761 = vmatpush1.xpose.msra.mxu0 0.0
        %762 = vmatprep.subr.mxu0 0.0
        %763 = vmatpush1.xpose.msra.mxu0 0.0
        %764 = vmatprep.subr.mxu0 0.0
        %765 = vmatpush1.xpose.msra.mxu0 0.0
        %766 = vmatprep.subr.mxu0 0.0
        %767 = vmatpush1.xpose.msra.mxu0 0.0
        %768 = vmatprep.subr.mxu0 0.0
        %769 = vmatpush1.xpose.msra.mxu0 0.0
        %770 = vmatprep.subr.mxu0 0.0
        %771 = vmatpush1.xpose.msra.mxu0 0.0
        %772 = vmatprep.subr.mxu0 0.0
        %773 = vmatpush1.xpose.msra.mxu0 0.0
        %774 = vmatprep.subr.mxu0 0.0
        %775 = vmatpush1.xpose.msra.mxu0 0.0
        %776 = vmatprep.subr.mxu0 0.0
        %777 = vmatpush1.xpose.msra.mxu0 0.0
        %778 = vmatprep.subr.mxu0 0.0
        %779 = vmatpush1.xpose.msra.mxu0 0.0
        %780 = vmatprep.subr.mxu0 0.0
        %781 = vmatpush1.xpose.msra.mxu0 0.0
        %782 = vmatprep.subr.mxu0 0.0
        %783 = vmatpush1.xpose.msra.mxu0 0.0
        %784 = vmatprep.subr.mxu0 0.0
        %785 = vmatpush1.xpose.msra.mxu0 0.0
        %786 = vmatprep.subr.mxu0 0.0
        %787 = vmatpush1.xpose.msra.mxu0 0.0
        %788 = vmatprep.subr.mxu0 0.0
        %789 = vmatpush1.xpose.msra.mxu0 0.0
        %790 = vmatprep.subr.mxu0 0.0
        %791 = vmatpush1.xpose.msra.mxu0 0.0
        %792 = vmatprep.subr.mxu0 0.0
        %793 = vmatpush1.xpose.msra.mxu0 0.0
        %794 = vmatprep.subr.mxu0 0.0
        %795 = vmatpush1.xpose.msra.mxu0 0.0
        %796 = vmatprep.subr.mxu0 0.0
        %797 = vmatpush1.xpose.msra.mxu0 0.0
        %798 = vmatprep.subr.mxu0 0.0
        %799 = vmatpush1.xpose.msra.mxu0 0.0
        %800 = vmatprep.subr.mxu0 0.0
        %801 = vmatpush1.xpose.msra.mxu0 0.0
        %802 = vmatprep.subr.mxu0 0.0
        %803 = vmatpush1.xpose.msra.mxu0 0.0
        %804 = vmatprep.subr.mxu0 0.0
        %805 = vmatpush1.xpose.msra.mxu0 0.0
        %806 = vmatprep.subr.mxu0 0.0
        %807 = vmatpush1.xpose.msra.mxu0 0.0
        %808 = vmatprep.subr.mxu0 0.0
        %809 = vmatpush1.xpose.msra.mxu0 0.0
        %810 = vmatprep.subr.mxu0 0.0
        %811 = vmatpush1.xpose.msra.mxu0 0.0
        %812 = vmatprep.mubr.f32.mxu0 0.0
        %813 = vmatmul.mubr.f32.gmra.mrb[0].mxu0 %v744
        %v814 = vpop.f32.mrb[0].mxu0
        %v815 = vadd.f32 0.0, %v814
        %v816 = vpop.f32.mrb[0].mxu0
        %817 = vdwg.mxu0
        %v818 = vsel %vm742, %v815, -inf
        %819 = vmax.xlane.f32.xlu0 %v818
        %v820 = vpop.xlane.xlu0 %819
        %v821 = vsub.f32 %v815, %v820
        %v822 = vmul.f32 %v821, 1.442695
        %v823 = vpow.pop %v822
        %v824 = vsel %vm742, %v823, 0.0
        %825 = vadd.xlane.f32.xlu0 %v824
        %v826 = vpop.xlane.xlu0 %825
        %v827 = vrcp.pop %v826
        %v828 = vmul.f32 %v826, %v827
        %v829 = vsub.f32 2.0, %v828
        %v830 = vmul.f32 %v827, %v829
        %v831 = vmul.f32 %v823, %v830
        %832 = vrot.lane.b32.xlu0 %v727, 64
        %v833 = vpop.permute.xlu0 %832
        %v836 = vsel %vm742, %v831, 0
        %838 = vmatprep.subr.mxu0 0.0
        %839 = vmatpush1.msra.mxu0 %v833
        %840 = vmatprep.subr.mxu0 0.0
        %841 = vmatpush1.msra.mxu0 0.0
        %842 = vmatprep.subr.mxu0 0.0
        %843 = vmatpush1.msra.mxu0 0.0
        %844 = vmatprep.subr.mxu0 0.0
        %845 = vmatpush1.msra.mxu0 0.0
        %846 = vmatprep.subr.mxu0 0.0
        %847 = vmatpush1.msra.mxu0 0.0
        %848 = vmatprep.subr.mxu0 0.0
        %849 = vmatpush1.msra.mxu0 0.0
        %850 = vmatprep.subr.mxu0 0.0
        %851 = vmatpush1.msra.mxu0 0.0
        %852 = vmatprep.subr.mxu0 0.0
        %853 = vmatpush1.msra.mxu0 0.0
        %854 = vmatprep.subr.mxu0 0.0
        %855 = vmatpush1.msra.mxu0 0.0
        %856 = vmatprep.subr.mxu0 0.0
        %857 = vmatpush1.msra.mxu0 0.0
        %858 = vmatprep.subr.mxu0 0.0
        %859 = vmatpush1.msra.mxu0 0.0
        %860 = vmatprep.subr.mxu0 0.0
        %861 = vmatpush1.msra.mxu0 0.0
        %862 = vmatprep.subr.mxu0 0.0
        %863 = vmatpush1.msra.mxu0 0.0
        %864 = vmatprep.subr.mxu0 0.0
        %865 = vmatpush1.msra.mxu0 0.0
        %866 = vmatprep.subr.mxu0 0.0
        %867 = vmatpush1.msra.mxu0 0.0
        %868 = vmatprep.subr.mxu0 0.0
        %869 = vmatpush1.msra.mxu0 0.0
        %870 = vmatprep.subr.mxu0 0.0
        %871 = vmatpush1.msra.mxu0 0.0
        %872 = vmatprep.subr.mxu0 0.0
        %873 = vmatpush1.msra.mxu0 0.0
        %874 = vmatprep.subr.mxu0 0.0
        %875 = vmatpush1.msra.mxu0 0.0
        %876 = vmatprep.subr.mxu0 0.0
        %877 = vmatpush1.msra.mxu0 0.0
        %878 = vmatprep.subr.mxu0 0.0
        %879 = vmatpush1.msra.mxu0 0.0
        %880 = vmatprep.subr.mxu0 0.0
        %881 = vmatpush1.msra.mxu0 0.0
        %882 = vmatprep.subr.mxu0 0.0
        %883 = vmatpush1.msra.mxu0 0.0
        %884 = vmatprep.subr.mxu0 0.0
        %885 = vmatpush1.msra.mxu0 0.0
        %886 = vmatprep.subr.mxu0 0.0
        %887 = vmatpush1.msra.mxu0 0.0
        %888 = vmatprep.subr.mxu0 0.0
        %889 = vmatpush1.msra.mxu0 0.0
        %890 = vmatprep.subr.mxu0 0.0
        %891 = vmatpush1.msra.mxu0 0.0
        %892 = vmatprep.subr.mxu0 0.0
        %893 = vmatpush1.msra.mxu0 0.0
        %894 = vmatprep.subr.mxu0 0.0
        %895 = vmatpush1.msra.mxu0 0.0
        %896 = vmatprep.subr.mxu0 0.0
        %897 = vmatpush1.msra.mxu0 0.0
        %898 = vmatprep.subr.mxu0 0.0
        %899 = vmatpush1.msra.mxu0 0.0
        %900 = vmatprep.subr.mxu0 0.0
        %901 = vmatpush1.msra.mxu0 0.0
        %902 = vmatprep.mubr.f32.mxu0 0.0
        %903 = vmatmul.mubr.f32.gmra.mrb[0].mxu0 %v836
        %v904 = vpop.f32.mrb[0].mxu0
        %v905 = vadd.f32 0.0, %v904
        %v906 = vpop.f32.mrb[0].mxu0
        %907 = vdwg.mxu0
        %v908 = vld [vmem:[#allocation11] sm:$0xff]
        %v910 = vsel %vm742, %v905, 0
        %912 = vmatprep.subr.mxu0 0.0
        %913 = vmatpush1.msra.mxu0 %v908
        %914 = vmatprep.subr.mxu0 0.0
        %915 = vmatpush1.msra.mxu0 0.0
        %916 = vmatprep.subr.mxu0 0.0
        %917 = vmatpush1.msra.mxu0 0.0
        %918 = vmatprep.subr.mxu0 0.0
        %919 = vmatpush1.msra.mxu0 0.0
        %920 = vmatprep.subr.mxu0 0.0
        %921 = vmatpush1.msra.mxu0 0.0
        %922 = vmatprep.subr.mxu0 0.0
        %923 = vmatpush1.msra.mxu0 0.0
        %924 = vmatprep.subr.mxu0 0.0
        %925 = vmatpush1.msra.mxu0 0.0
        %926 = vmatprep.subr.mxu0 0.0
        %927 = vmatpush1.msra.mxu0 0.0
        %928 = vmatprep.subr.mxu0 0.0
        %929 = vmatpush1.msra.mxu0 0.0
        %930 = vmatprep.subr.mxu0 0.0
        %931 = vmatpush1.msra.mxu0 0.0
        %932 = vmatprep.subr.mxu0 0.0
        %933 = vmatpush1.msra.mxu0 0.0
        %934 = vmatprep.subr.mxu0 0.0
        %935 = vmatpush1.msra.mxu0 0.0
        %936 = vmatprep.subr.mxu0 0.0
        %937 = vmatpush1.msra.mxu0 0.0
        %938 = vmatprep.subr.mxu0 0.0
        %939 = vmatpush1.msra.mxu0 0.0
        %940 = vmatprep.subr.mxu0 0.0
        %941 = vmatpush1.msra.mxu0 0.0
        %942 = vmatprep.subr.mxu0 0.0
        %943 = vmatpush1.msra.mxu0 0.0
        %944 = vmatprep.subr.mxu0 0.0
        %945 = vmatpush1.msra.mxu0 0.0
        %946 = vmatprep.subr.mxu0 0.0
        %947 = vmatpush1.msra.mxu0 0.0
        %948 = vmatprep.subr.mxu0 0.0
        %949 = vmatpush1.msra.mxu0 0.0
        %950 = vmatprep.subr.mxu0 0.0
        %951 = vmatpush1.msra.mxu0 0.0
        %952 = vmatprep.subr.mxu0 0.0
        %953 = vmatpush1.msra.mxu0 0.0
        %954 = vmatprep.subr.mxu0 0.0
        %955 = vmatpush1.msra.mxu0 0.0
        %956 = vmatprep.subr.mxu0 0.0
        %957 = vmatpush1.msra.mxu0 0.0
        %958 = vmatprep.subr.mxu0 0.0
        %959 = vmatpush1.msra.mxu0 0.0
        %960 = vmatprep.subr.mxu0 0.0
        %961 = vmatpush1.msra.mxu0 0.0
        %962 = vmatprep.subr.mxu0 0.0
        %963 = vmatpush1.msra.mxu0 0.0
        %964 = vmatprep.subr.mxu0 0.0
        %965 = vmatpush1.msra.mxu0 0.0
        %966 = vmatprep.subr.mxu0 0.0
        %967 = vmatpush1.msra.mxu0 0.0
        %968 = vmatprep.subr.mxu0 0.0
        %969 = vmatpush1.msra.mxu0 0.0
        %970 = vmatprep.subr.mxu0 0.0
        %971 = vmatpush1.msra.mxu0 0.0
        %972 = vmatprep.subr.mxu0 0.0
        %973 = vmatpush1.msra.mxu0 0.0
        %974 = vmatprep.subr.mxu0 0.0
        %975 = vmatpush1.msra.mxu0 0.0
        %976 = vmatprep.mubr.f32.mxu0 0.0
        %977 = vmatmul.mubr.f32.gmra.mrb[0].mxu0 %v910
        %v978 = vpop.f32.mrb[0].mxu0
        %v979 = vadd.f32 0.0, %v978
        %v980 = vpop.f32.mrb[0].mxu0
        %981 = vdwg.mxu0
        %v982 = vadd.f32 %v737, %v979
        %983 = vrot.lane.b32.xlu0 %v738, 120
        %v984 = vpop.permute.xlu0 %983
        %985 = vrot.lane.b32.xlu0 %v727, 88
        %v986 = vpop.permute.xlu0 %985
        %v987 = vsel %vm742, %v984, 0
        %v989 = vsel %vm742, %v986, 0
        %991 = vmatprep.subr.mxu0 0.0
        %992 = vmatpush1.xpose.msra.mxu0 %v989
        %993 = vmatprep.subr.mxu0 0.0
        %994 = vmatpush1.xpose.msra.mxu0 0.0
        %995 = vmatprep.subr.mxu0 0.0
        %996 = vmatpush1.xpose.msra.mxu0 0.0
        %997 = vmatprep.subr.mxu0 0.0
        %998 = vmatpush1.xpose.msra.mxu0 0.0
        %999 = vmatprep.subr.mxu0 0.0
        %1000 = vmatpush1.xpose.msra.mxu0 0.0
        %1001 = vmatprep.subr.mxu0 0.0
        %1002 = vmatpush1.xpose.msra.mxu0 0.0
        %1003 = vmatprep.subr.mxu0 0.0
        %1004 = vmatpush1.xpose.msra.mxu0 0.0
        %1005 = vmatprep.subr.mxu0 0.0
        %1006 = vmatpush1.xpose.msra.mxu0 0.0
        %1007 = vmatprep.subr.mxu0 0.0
        %1008 = vmatpush1.xpose.msra.mxu0 0.0
        %1009 = vmatprep.subr.mxu0 0.0
        %1010 = vmatpush1.xpose.msra.mxu0 0.0
        %1011 = vmatprep.subr.mxu0 0.0
        %1012 = vmatpush1.xpose.msra.mxu0 0.0
        %1013 = vmatprep.subr.mxu0 0.0
        %1014 = vmatpush1.xpose.msra.mxu0 0.0
        %1015 = vmatprep.subr.mxu0 0.0
        %1016 = vmatpush1.xpose.msra.mxu0 0.0
        %1017 = vmatprep.subr.mxu0 0.0
        %1018 = vmatpush1.xpose.msra.mxu0 0.0
        %1019 = vmatprep.subr.mxu0 0.0
        %1020 = vmatpush1.xpose.msra.mxu0 0.0
        %1021 = vmatprep.subr.mxu0 0.0
        %1022 = vmatpush1.xpose.msra.mxu0 0.0
        %1023 = vmatprep.subr.mxu0 0.0
        %1024 = vmatpush1.xpose.msra.mxu0 0.0
        %1025 = vmatprep.subr.mxu0 0.0
        %1026 = vmatpush1.xpose.msra.mxu0 0.0
        %1027 = vmatprep.subr.mxu0 0.0
        %1028 = vmatpush1.xpose.msra.mxu0 0.0
        %1029 = vmatprep.subr.mxu0 0.0
        %1030 = vmatpush1.xpose.msra.mxu0 0.0
        %1031 = vmatprep.subr.mxu0 0.0
        %1032 = vmatpush1.xpose.msra.mxu0 0.0
        %1033 = vmatprep.subr.mxu0 0.0
        %1034 = vmatpush1.xpose.msra.mxu0 0.0
        %1035 = vmatprep.subr.mxu0 0.0
        %1036 = vmatpush1.xpose.msra.mxu0 0.0
        %1037 = vmatprep.subr.mxu0 0.0
        %1038 = vmatpush1.xpose.msra.mxu0 0.0
        %1039 = vmatprep.subr.mxu0 0.0
        %1040 = vmatpush1.xpose.msra.mxu0 0.0
        %1041 = vmatprep.subr.mxu0 0.0
        %1042 = vmatpush1.xpose.msra.mxu0 0.0
        %1043 = vmatprep.subr.mxu0 0.0
        %1044 = vmatpush1.xpose.msra.mxu0 0.0
        %1045 = vmatprep.subr.mxu0 0.0
        %1046 = vmatpush1.xpose.msra.mxu0 0.0
        %1047 = vmatprep.subr.mxu0 0.0
        %1048 = vmatpush1.xpose.msra.mxu0 0.0
        %1049 = vmatprep.subr.mxu0 0.0
        %1050 = vmatpush1.xpose.msra.mxu0 0.0
        %1051 = vmatprep.subr.mxu0 0.0
        %1052 = vmatpush1.xpose.msra.mxu0 0.0
        %1053 = vmatprep.subr.mxu0 0.0
        %1054 = vmatpush1.xpose.msra.mxu0 0.0
        %1055 = vmatprep.mubr.f32.mxu0 0.0
        %1056 = vmatmul.mubr.f32.gmra.mrb[0].mxu0 %v987
        %v1057 = vpop.f32.mrb[0].mxu0
        %v1058 = vadd.f32 0.0, %v1057
        %v1059 = vpop.f32.mrb[0].mxu0
        %1060 = vdwg.mxu0
        %v1061 = vsel %vm742, %v1058, -inf
        %1062 = vmax.xlane.f32.xlu0 %v1061
        %v1063 = vpop.xlane.xlu0 %1062
        %v1064 = vsub.f32 %v1058, %v1063
        %v1065 = vmul.f32 %v1064, 1.442695
        %v1066 = vpow.pop %v1065
        %v1067 = vsel %vm742, %v1066, 0.0
        %1068 = vadd.xlane.f32.xlu0 %v1067
        %v1069 = vpop.xlane.xlu0 %1068
        %v1070 = vrcp.pop %v1069
        %v1071 = vmul.f32 %v1069, %v1070
        %v1072 = vsub.f32 2.0, %v1071
        %v1073 = vmul.f32 %v1070, %v1072
        %v1074 = vmul.f32 %v1066, %v1073
        %1075 = vrot.lane.b32.xlu0 %v727, 56
        %v1076 = vpop.permute.xlu0 %1075
        %v1079 = vsel %vm742, %v1074, 0
        %1081 = vmatprep.subr.mxu0 0.0
        %1082 = vmatpush1.msra.mxu0 %v1076
        %1083 = vmatprep.subr.mxu0 0.0
        %1084 = vmatpush1.msra.mxu0 0.0
        %1085 = vmatprep.subr.mxu0 0.0
        %1086 = vmatpush1.msra.mxu0 0.0
        %1087 = vmatprep.subr.mxu0 0.0
        %1088 = vmatpush1.msra.mxu0 0.0
        %1089 = vmatprep.subr.mxu0 0.0
        %1090 = vmatpush1.msra.mxu0 0.0
        %1091 = vmatprep.subr.mxu0 0.0
        %1092 = vmatpush1.msra.mxu0 0.0
        %1093 = vmatprep.subr.mxu0 0.0
        %1094 = vmatpush1.msra.mxu0 0.0
        %1095 = vmatprep.subr.mxu0 0.0
        %1096 = vmatpush1.msra.mxu0 0.0
        %1097 = vmatprep.subr.mxu0 0.0
        %1098 = vmatpush1.msra.mxu0 0.0
        %1099 = vmatprep.subr.mxu0 0.0
        %1100 = vmatpush1.msra.mxu0 0.0
        %1101 = vmatprep.subr.mxu0 0.0
        %1102 = vmatpush1.msra.mxu0 0.0
        %1103 = vmatprep.subr.mxu0 0.0
        %1104 = vmatpush1.msra.mxu0 0.0
        %1105 = vmatprep.subr.mxu0 0.0
        %1106 = vmatpush1.msra.mxu0 0.0
        %1107 = vmatprep.subr.mxu0 0.0
        %1108 = vmatpush1.msra.mxu0 0.0
        %1109 = vmatprep.subr.mxu0 0.0
        %1110 = vmatpush1.msra.mxu0 0.0
        %1111 = vmatprep.subr.mxu0 0.0
        %1112 = vmatpush1.msra.mxu0 0.0
        %1113 = vmatprep.subr.mxu0 0.0
        %1114 = vmatpush1.msra.mxu0 0.0
        %1115 = vmatprep.subr.mxu0 0.0
        %1116 = vmatpush1.msra.mxu0 0.0
        %1117 = vmatprep.subr.mxu0 0.0
        %1118 = vmatpush1.msra.mxu0 0.0
        %1119 = vmatprep.subr.mxu0 0.0
        %1120 = vmatpush1.msra.mxu0 0.0
        %1121 = vmatprep.subr.mxu0 0.0
        %1122 = vmatpush1.msra.mxu0 0.0
        %1123 = vmatprep.subr.mxu0 0.0
        %1124 = vmatpush1.msra.mxu0 0.0
        %1125 = vmatprep.subr.mxu0 0.0
        %1126 = vmatpush1.msra.mxu0 0.0
        %1127 = vmatprep.subr.mxu0 0.0
        %1128 = vmatpush1.msra.mxu0 0.0
        %1129 = vmatprep.subr.mxu0 0.0
        %1130 = vmatpush1.msra.mxu0 0.0
        %1131 = vmatprep.subr.mxu0 0.0
        %1132 = vmatpush1.msra.mxu0 0.0
        %1133 = vmatprep.subr.mxu0 0.0
        %1134 = vmatpush1.msra.mxu0 0.0
        %1135 = vmatprep.subr.mxu0 0.0
        %1136 = vmatpush1.msra.mxu0 0.0
        %1137 = vmatprep.subr.mxu0 0.0
        %1138 = vmatpush1.msra.mxu0 0.0
        %1139 = vmatprep.subr.mxu0 0.0
        %1140 = vmatpush1.msra.mxu0 0.0
        %1141 = vmatprep.subr.mxu0 0.0
        %1142 = vmatpush1.msra.mxu0 0.0
        %1143 = vmatprep.subr.mxu0 0.0
        %1144 = vmatpush1.msra.mxu0 0.0
        %1145 = vmatprep.mubr.f32.mxu0 0.0
        %1146 = vmatmul.mubr.f32.gmra.mrb[0].mxu0 %v1079
        %v1147 = vpop.f32.mrb[0].mxu0
        %v1148 = vadd.f32 0.0, %v1147
        %v1149 = vpop.f32.mrb[0].mxu0
        %1150 = vdwg.mxu0
        %v1151 = vld [vmem:[#allocation11 + $0x8] sm:$0xff]
        %v1153 = vsel %vm742, %v1148, 0
        %1155 = vmatprep.subr.mxu0 0.0
        %1156 = vmatpush1.msra.mxu0 %v1151
        %1157 = vmatprep.subr.mxu0 0.0
        %1158 = vmatpush1.msra.mxu0 0.0
        %1159 = vmatprep.subr.mxu0 0.0
        %1160 = vmatpush1.msra.mxu0 0.0
        %1161 = vmatprep.subr.mxu0 0.0
        %1162 = vmatpush1.msra.mxu0 0.0
        %1163 = vmatprep.subr.mxu0 0.0
        %1164 = vmatpush1.msra.mxu0 0.0
        %1165 = vmatprep.subr.mxu0 0.0
        %1166 = vmatpush1.msra.mxu0 0.0
        %1167 = vmatprep.subr.mxu0 0.0
        %1168 = vmatpush1.msra.mxu0 0.0
        %1169 = vmatprep.subr.mxu0 0.0
        %1170 = vmatpush1.msra.mxu0 0.0
        %1171 = vmatprep.subr.mxu0 0.0
        %1172 = vmatpush1.msra.mxu0 0.0
        %1173 = vmatprep.subr.mxu0 0.0
        %1174 = vmatpush1.msra.mxu0 0.0
        %1175 = vmatprep.subr.mxu0 0.0
        %1176 = vmatpush1.msra.mxu0 0.0
        %1177 = vmatprep.subr.mxu0 0.0
        %1178 = vmatpush1.msra.mxu0 0.0
        %1179 = vmatprep.subr.mxu0 0.0
        %1180 = vmatpush1.msra.mxu0 0.0
        %1181 = vmatprep.subr.mxu0 0.0
        %1182 = vmatpush1.msra.mxu0 0.0
        %1183 = vmatprep.subr.mxu0 0.0
        %1184 = vmatpush1.msra.mxu0 0.0
        %1185 = vmatprep.subr.mxu0 0.0
        %1186 = vmatpush1.msra.mxu0 0.0
        %1187 = vmatprep.subr.mxu0 0.0
        %1188 = vmatpush1.msra.mxu0 0.0
        %1189 = vmatprep.subr.mxu0 0.0
        %1190 = vmatpush1.msra.mxu0 0.0
        %1191 = vmatprep.subr.mxu0 0.0
        %1192 = vmatpush1.msra.mxu0 0.0
        %1193 = vmatprep.subr.mxu0 0.0
        %1194 = vmatpush1.msra.mxu0 0.0
        %1195 = vmatprep.subr.mxu0 0.0
        %1196 = vmatpush1.msra.mxu0 0.0
        %1197 = vmatprep.subr.mxu0 0.0
        %1198 = vmatpush1.msra.mxu0 0.0
        %1199 = vmatprep.subr.mxu0 0.0
        %1200 = vmatpush1.msra.mxu0 0.0
        %1201 = vmatprep.subr.mxu0 0.0
        %1202 = vmatpush1.msra.mxu0 0.0
        %1203 = vmatprep.subr.mxu0 0.0
        %1204 = vmatpush1.msra.mxu0 0.0
        %1205 = vmatprep.subr.mxu0 0.0
        %1206 = vmatpush1.msra.mxu0 0.0
        %1207 = vmatprep.subr.mxu0 0.0
        %1208 = vmatpush1.msra.mxu0 0.0
        %1209 = vmatprep.subr.mxu0 0.0
        %1210 = vmatpush1.msra.mxu0 0.0
        %1211 = vmatprep.subr.mxu0 0.0
        %1212 = vmatpush1.msra.mxu0 0.0
        %1213 = vmatprep.subr.mxu0 0.0
        %1214 = vmatpush1.msra.mxu0 0.0
        %1215 = vmatprep.subr.mxu0 0.0
        %1216 = vmatpush1.msra.mxu0 0.0
        %1217 = vmatprep.subr.mxu0 0.0
        %1218 = vmatpush1.msra.mxu0 0.0
        %1219 = vmatprep.mubr.f32.mxu0 0.0
        %1220 = vmatmul.mubr.f32.gmra.mrb[0].mxu0 %v1153
        %v1221 = vpop.f32.mrb[0].mxu0
        %v1222 = vadd.f32 0.0, %v1221
        %v1223 = vpop.f32.mrb[0].mxu0
        %1224 = vdwg.mxu0
        %v1225 = vadd.f32 %v982, %v1222
        %1226 = vrot.lane.b32.xlu0 %v738, 112
        %v1227 = vpop.permute.xlu0 %1226
        %1228 = vrot.lane.b32.xlu0 %v727, 80
        %v1229 = vpop.permute.xlu0 %1228
        %v1230 = vsel %vm742, %v1227, 0
        %v1232 = vsel %vm742, %v1229, 0
        %1234 = vmatprep.subr.mxu0 0.0
        %1235 = vmatpush1.xpose.msra.mxu0 %v1232
        %1236 = vmatprep.subr.mxu0 0.0
        %1237 = vmatpush1.xpose.msra.mxu0 0.0
        %1238 = vmatprep.subr.mxu0 0.0
        %1239 = vmatpush1.xpose.msra.mxu0 0.0
        %1240 = vmatprep.subr.mxu0 0.0
        %1241 = vmatpush1.xpose.msra.mxu0 0.0
        %1242 = vmatprep.subr.mxu0 0.0
        %1243 = vmatpush1.xpose.msra.mxu0 0.0
        %1244 = vmatprep.subr.mxu0 0.0
        %1245 = vmatpush1.xpose.msra.mxu0 0.0
        %1246 = vmatprep.subr.mxu0 0.0
        %1247 = vmatpush1.xpose.msra.mxu0 0.0
        %1248 = vmatprep.subr.mxu0 0.0
        %1249 = vmatpush1.xpose.msra.mxu0 0.0
        %1250 = vmatprep.subr.mxu0 0.0
        %1251 = vmatpush1.xpose.msra.mxu0 0.0
        %1252 = vmatprep.subr.mxu0 0.0
        %1253 = vmatpush1.xpose.msra.mxu0 0.0
        %1254 = vmatprep.subr.mxu0 0.0
        %1255 = vmatpush1.xpose.msra.mxu0 0.0
        %1256 = vmatprep.subr.mxu0 0.0
        %1257 = vmatpush1.xpose.msra.mxu0 0.0
        %1258 = vmatprep.subr.mxu0 0.0
        %1259 = vmatpush1.xpose.msra.mxu0 0.0
        %1260 = vmatprep.subr.mxu0 0.0
        %1261 = vmatpush1.xpose.msra.mxu0 0.0
        %1262 = vmatprep.subr.mxu0 0.0
        %1263 = vmatpush1.xpose.msra.mxu0 0.0
        %1264 = vmatprep.subr.mxu0 0.0
        %1265 = vmatpush1.xpose.msra.mxu0 0.0
        %1266 = vmatprep.subr.mxu0 0.0
        %1267 = vmatpush1.xpose.msra.mxu0 0.0
        %1268 = vmatprep.subr.mxu0 0.0
        %1269 = vmatpush1.xpose.msra.mxu0 0.0
        %1270 = vmatprep.subr.mxu0 0.0
        %1271 = vmatpush1.xpose.msra.mxu0 0.0
        %1272 = vmatprep.subr.mxu0 0.0
        %1273 = vmatpush1.xpose.msra.mxu0 0.0
        %1274 = vmatprep.subr.mxu0 0.0
        %1275 = vmatpush1.xpose.msra.mxu0 0.0
        %1276 = vmatprep.subr.mxu0 0.0
        %1277 = vmatpush1.xpose.msra.mxu0 0.0
        %1278 = vmatprep.subr.mxu0 0.0
        %1279 = vmatpush1.xpose.msra.mxu0 0.0
        %1280 = vmatprep.subr.mxu0 0.0
        %1281 = vmatpush1.xpose.msra.mxu0 0.0
        %1282 = vmatprep.subr.mxu0 0.0
        %1283 = vmatpush1.xpose.msra.mxu0 0.0
        %1284 = vmatprep.subr.mxu0 0.0
        %1285 = vmatpush1.xpose.msra.mxu0 0.0
        %1286 = vmatprep.subr.mxu0 0.0
        %1287 = vmatpush1.xpose.msra.mxu0 0.0
        %1288 = vmatprep.subr.mxu0 0.0
        %1289 = vmatpush1.xpose.msra.mxu0 0.0
        %1290 = vmatprep.subr.mxu0 0.0
        %1291 = vmatpush1.xpose.msra.mxu0 0.0
        %1292 = vmatprep.subr.mxu0 0.0
        %1293 = vmatpush1.xpose.msra.mxu0 0.0
        %1294 = vmatprep.subr.mxu0 0.0
        %1295 = vmatpush1.xpose.msra.mxu0 0.0
        %1296 = vmatprep.subr.mxu0 0.0
        %1297 = vmatpush1.xpose.msra.mxu0 0.0
        %1298 = vmatprep.mubr.f32.mxu0 0.0
        %1299 = vmatmul.mubr.f32.gmra.mrb[0].mxu0 %v1230
        %v1300 = vpop.f32.mrb[0].mxu0
        %v1301 = vadd.f32 0.0, %v1300
        %v1302 = vpop.f32.mrb[0].mxu0
        %1303 = vdwg.mxu0
        %v1304 = vsel %vm742, %v1301, -inf
        %1305 = vmax.xlane.f32.xlu0 %v1304
        %v1306 = vpop.xlane.xlu0 %1305
        %v1307 = vsub.f32 %v1301, %v1306
        %v1308 = vmul.f32 %v1307, 1.442695
        %v1309 = vpow.pop %v1308
        %v1310 = vsel %vm742, %v1309, 0.0
        %1311 = vadd.xlane.f32.xlu0 %v1310
        %v1312 = vpop.xlane.xlu0 %1311
        %v1313 = vrcp.pop %v1312
        %v1314 = vmul.f32 %v1312, %v1313
        %v1315 = vsub.f32 2.0, %v1314
        %v1316 = vmul.f32 %v1313, %v1315
        %v1317 = vmul.f32 %v1309, %v1316
        %1318 = vrot.lane.b32.xlu0 %v727, 48
        %v1319 = vpop.permute.xlu0 %1318
        %v1322 = vsel %vm742, %v1317, 0
        %1324 = vmatprep.subr.mxu0 0.0
        %1325 = vmatpush1.msra.mxu0 %v1319
        %1326 = vmatprep.subr.mxu0 0.0
        %1327 = vmatpush1.msra.mxu0 0.0
        %1328 = vmatprep.subr.mxu0 0.0
        %1329 = vmatpush1.msra.mxu0 0.0
        %1330 = vmatprep.subr.mxu0 0.0
        %1331 = vmatpush1.msra.mxu0 0.0
        %1332 = vmatprep.subr.mxu0 0.0
        %1333 = vmatpush1.msra.mxu0 0.0
        %1334 = vmatprep.subr.mxu0 0.0
        %1335 = vmatpush1.msra.mxu0 0.0
        %1336 = vmatprep.subr.mxu0 0.0
        %1337 = vmatpush1.msra.mxu0 0.0
        %1338 = vmatprep.subr.mxu0 0.0
        %1339 = vmatpush1.msra.mxu0 0.0
        %1340 = vmatprep.subr.mxu0 0.0
        %1341 = vmatpush1.msra.mxu0 0.0
        %1342 = vmatprep.subr.mxu0 0.0
        %1343 = vmatpush1.msra.mxu0 0.0
        %1344 = vmatprep.subr.mxu0 0.0
        %1345 = vmatpush1.msra.mxu0 0.0
        %1346 = vmatprep.subr.mxu0 0.0
        %1347 = vmatpush1.msra.mxu0 0.0
        %1348 = vmatprep.subr.mxu0 0.0
        %1349 = vmatpush1.msra.mxu0 0.0
        %1350 = vmatprep.subr.mxu0 0.0
        %1351 = vmatpush1.msra.mxu0 0.0
        %1352 = vmatprep.subr.mxu0 0.0
        %1353 = vmatpush1.msra.mxu0 0.0
        %1354 = vmatprep.subr.mxu0 0.0
        %1355 = vmatpush1.msra.mxu0 0.0
        %1356 = vmatprep.subr.mxu0 0.0
        %1357 = vmatpush1.msra.mxu0 0.0
        %1358 = vmatprep.subr.mxu0 0.0
        %1359 = vmatpush1.msra.mxu0 0.0
        %1360 = vmatprep.subr.mxu0 0.0
        %1361 = vmatpush1.msra.mxu0 0.0
        %1362 = vmatprep.subr.mxu0 0.0
        %1363 = vmatpush1.msra.mxu0 0.0
        %1364 = vmatprep.subr.mxu0 0.0
        %1365 = vmatpush1.msra.mxu0 0.0
        %1366 = vmatprep.subr.mxu0 0.0
        %1367 = vmatpush1.msra.mxu0 0.0
        %1368 = vmatprep.subr.mxu0 0.0
        %1369 = vmatpush1.msra.mxu0 0.0
        %1370 = vmatprep.subr.mxu0 0.0
        %1371 = vmatpush1.msra.mxu0 0.0
        %1372 = vmatprep.subr.mxu0 0.0
        %1373 = vmatpush1.msra.mxu0 0.0
        %1374 = vmatprep.subr.mxu0 0.0
        %1375 = vmatpush1.msra.mxu0 0.0
        %1376 = vmatprep.subr.mxu0 0.0
        %1377 = vmatpush1.msra.mxu0 0.0
        %1378 = vmatprep.subr.mxu0 0.0
        %1379 = vmatpush1.msra.mxu0 0.0
        %1380 = vmatprep.subr.mxu0 0.0
        %1381 = vmatpush1.msra.mxu0 0.0
        %1382 = vmatprep.subr.mxu0 0.0
        %1383 = vmatpush1.msra.mxu0 0.0
        %1384 = vmatprep.subr.mxu0 0.0
        %1385 = vmatpush1.msra.mxu0 0.0
        %1386 = vmatprep.subr.mxu0 0.0
        %1387 = vmatpush1.msra.mxu0 0.0
        %1388 = vmatprep.mubr.f32.mxu0 0.0
        %1389 = vmatmul.mubr.f32.gmra.mrb[0].mxu0 %v1322
        %v1390 = vpop.f32.mrb[0].mxu0
        %v1391 = vadd.f32 0.0, %v1390
        %v1392 = vpop.f32.mrb[0].mxu0
        %1393 = vdwg.mxu0
        %v1394 = vld [vmem:[#allocation11 + $0x10] sm:$0xff]
        %v1396 = vsel %vm742, %v1391, 0
        %1398 = vmatprep.subr.mxu0 0.0
        %1399 = vmatpush1.msra.mxu0 %v1394
        %1400 = vmatprep.subr.mxu0 0.0
        %1401 = vmatpush1.msra.mxu0 0.0
        %1402 = vmatprep.subr.mxu0 0.0
        %1403 = vmatpush1.msra.mxu0 0.0
        %1404 = vmatprep.subr.mxu0 0.0
        %1405 = vmatpush1.msra.mxu0 0.0
        %1406 = vmatprep.subr.mxu0 0.0
        %1407 = vmatpush1.msra.mxu0 0.0
        %1408 = vmatprep.subr.mxu0 0.0
        %1409 = vmatpush1.msra.mxu0 0.0
        %1410 = vmatprep.subr.mxu0 0.0
        %1411 = vmatpush1.msra.mxu0 0.0
        %1412 = vmatprep.subr.mxu0 0.0
        %1413 = vmatpush1.msra.mxu0 0.0
        %1414 = vmatprep.subr.mxu0 0.0
        %1415 = vmatpush1.msra.mxu0 0.0
        %1416 = vmatprep.subr.mxu0 0.0
        %1417 = vmatpush1.msra.mxu0 0.0
        %1418 = vmatprep.subr.mxu0 0.0
        %1419 = vmatpush1.msra.mxu0 0.0
        %1420 = vmatprep.subr.mxu0 0.0
        %1421 = vmatpush1.msra.mxu0 0.0
        %1422 = vmatprep.subr.mxu0 0.0
        %1423 = vmatpush1.msra.mxu0 0.0
        %1424 = vmatprep.subr.mxu0 0.0
        %1425 = vmatpush1.msra.mxu0 0.0
        %1426 = vmatprep.subr.mxu0 0.0
        %1427 = vmatpush1.msra.mxu0 0.0
        %1428 = vmatprep.subr.mxu0 0.0
        %1429 = vmatpush1.msra.mxu0 0.0
        %1430 = vmatprep.subr.mxu0 0.0
        %1431 = vmatpush1.msra.mxu0 0.0
        %1432 = vmatprep.subr.mxu0 0.0
        %1433 = vmatpush1.msra.mxu0 0.0
        %1434 = vmatprep.subr.mxu0 0.0
        %1435 = vmatpush1.msra.mxu0 0.0
        %1436 = vmatprep.subr.mxu0 0.0
        %1437 = vmatpush1.msra.mxu0 0.0
        %1438 = vmatprep.subr.mxu0 0.0
        %1439 = vmatpush1.msra.mxu0 0.0
        %1440 = vmatprep.subr.mxu0 0.0
        %1441 = vmatpush1.msra.mxu0 0.0
        %1442 = vmatprep.subr.mxu0 0.0
        %1443 = vmatpush1.msra.mxu0 0.0
        %1444 = vmatprep.subr.mxu0 0.0
        %1445 = vmatpush1.msra.mxu0 0.0
        %1446 = vmatprep.subr.mxu0 0.0
        %1447 = vmatpush1.msra.mxu0 0.0
        %1448 = vmatprep.subr.mxu0 0.0
        %1449 = vmatpush1.msra.mxu0 0.0
        %1450 = vmatprep.subr.mxu0 0.0
        %1451 = vmatpush1.msra.mxu0 0.0
        %1452 = vmatprep.subr.mxu0 0.0
        %1453 = vmatpush1.msra.mxu0 0.0
        %1454 = vmatprep.subr.mxu0 0.0
        %1455 = vmatpush1.msra.mxu0 0.0
        %1456 = vmatprep.subr.mxu0 0.0
        %1457 = vmatpush1.msra.mxu0 0.0
        %1458 = vmatprep.subr.mxu0 0.0
        %1459 = vmatpush1.msra.mxu0 0.0
        %1460 = vmatprep.subr.mxu0 0.0
        %1461 = vmatpush1.msra.mxu0 0.0
        %1462 = vmatprep.mubr.f32.mxu0 0.0
        %1463 = vmatmul.mubr.f32.gmra.mrb[0].mxu0 %v1396
        %v1464 = vpop.f32.mrb[0].mxu0
        %v1465 = vadd.f32 0.0, %v1464
        %v1466 = vpop.f32.mrb[0].mxu0
        %1467 = vdwg.mxu0
        %v1468 = vadd.f32 %v1225, %v1465
        %1469 = vrot.lane.b32.xlu0 %v738, 104
        %v1470 = vpop.permute.xlu0 %1469
        %1471 = vrot.lane.b32.xlu0 %v727, 72
        %v1472 = vpop.permute.xlu0 %1471
        %v1473 = vsel %vm742, %v1470, 0
        %v1475 = vsel %vm742, %v1472, 0
        %1477 = vmatprep.subr.mxu0 0.0
        %1478 = vmatpush1.xpose.msra.mxu0 %v1475
        %1479 = vmatprep.subr.mxu0 0.0
        %1480 = vmatpush1.xpose.msra.mxu0 0.0
        %1481 = vmatprep.subr.mxu0 0.0
        %1482 = vmatpush1.xpose.msra.mxu0 0.0
        %1483 = vmatprep.subr.mxu0 0.0
        %1484 = vmatpush1.xpose.msra.mxu0 0.0
        %1485 = vmatprep.subr.mxu0 0.0
        %1486 = vmatpush1.xpose.msra.mxu0 0.0
        %1487 = vmatprep.subr.mxu0 0.0
        %1488 = vmatpush1.xpose.msra.mxu0 0.0
        %1489 = vmatprep.subr.mxu0 0.0
        %1490 = vmatpush1.xpose.msra.mxu0 0.0
        %1491 = vmatprep.subr.mxu0 0.0
        %1492 = vmatpush1.xpose.msra.mxu0 0.0
        %1493 = vmatprep.subr.mxu0 0.0
        %1494 = vmatpush1.xpose.msra.mxu0 0.0
        %1495 = vmatprep.subr.mxu0 0.0
        %1496 = vmatpush1.xpose.msra.mxu0 0.0
        %1497 = vmatprep.subr.mxu0 0.0
        %1498 = vmatpush1.xpose.msra.mxu0 0.0
        %1499 = vmatprep.subr.mxu0 0.0
        %1500 = vmatpush1.xpose.msra.mxu0 0.0
        %1501 = vmatprep.subr.mxu0 0.0
        %1502 = vmatpush1.xpose.msra.mxu0 0.0
        %1503 = vmatprep.subr.mxu0 0.0
        %1504 = vmatpush1.xpose.msra.mxu0 0.0
        %1505 = vmatprep.subr.mxu0 0.0
        %1506 = vmatpush1.xpose.msra.mxu0 0.0
        %1507 = vmatprep.subr.mxu0 0.0
        %1508 = vmatpush1.xpose.msra.mxu0 0.0
        %1509 = vmatprep.subr.mxu0 0.0
        %1510 = vmatpush1.xpose.msra.mxu0 0.0
        %1511 = vmatprep.subr.mxu0 0.0
        %1512 = vmatpush1.xpose.msra.mxu0 0.0
        %1513 = vmatprep.subr.mxu0 0.0
        %1514 = vmatpush1.xpose.msra.mxu0 0.0
        %1515 = vmatprep.subr.mxu0 0.0
        %1516 = vmatpush1.xpose.msra.mxu0 0.0
        %1517 = vmatprep.subr.mxu0 0.0
        %1518 = vmatpush1.xpose.msra.mxu0 0.0
        %1519 = vmatprep.subr.mxu0 0.0
        %1520 = vmatpush1.xpose.msra.mxu0 0.0
        %1521 = vmatprep.subr.mxu0 0.0
        %1522 = vmatpush1.xpose.msra.mxu0 0.0
        %1523 = vmatprep.subr.mxu0 0.0
        %1524 = vmatpush1.xpose.msra.mxu0 0.0
        %1525 = vmatprep.subr.mxu0 0.0
        %1526 = vmatpush1.xpose.msra.mxu0 0.0
        %1527 = vmatprep.subr.mxu0 0.0
        %1528 = vmatpush1.xpose.msra.mxu0 0.0
        %1529 = vmatprep.subr.mxu0 0.0
        %1530 = vmatpush1.xpose.msra.mxu0 0.0
        %1531 = vmatprep.subr.mxu0 0.0
        %1532 = vmatpush1.xpose.msra.mxu0 0.0
        %1533 = vmatprep.subr.mxu0 0.0
        %1534 = vmatpush1.xpose.msra.mxu0 0.0
        %1535 = vmatprep.subr.mxu0 0.0
        %1536 = vmatpush1.xpose.msra.mxu0 0.0
        %1537 = vmatprep.subr.mxu0 0.0
        %1538 = vmatpush1.xpose.msra.mxu0 0.0
        %1539 = vmatprep.subr.mxu0 0.0
        %1540 = vmatpush1.xpose.msra.mxu0 0.0
        %1541 = vmatprep.mubr.f32.mxu0 0.0
        %1542 = vmatmul.mubr.f32.gmra.mrb[0].mxu0 %v1473
        %v1543 = vpop.f32.mrb[0].mxu0
        %v1544 = vadd.f32 0.0, %v1543
        %v1545 = vpop.f32.mrb[0].mxu0
        %1546 = vdwg.mxu0
        %v1547 = vsel %vm742, %v1544, -inf
        %1548 = vmax.xlane.f32.xlu0 %v1547
        %v1549 = vpop.xlane.xlu0 %1548
        %v1550 = vsub.f32 %v1544, %v1549
        %v1551 = vmul.f32 %v1550, 1.442695
        %v1552 = vpow.pop %v1551
        %v1553 = vsel %vm742, %v1552, 0.0
        %1554 = vadd.xlane.f32.xlu0 %v1553
        %v1555 = vpop.xlane.xlu0 %1554
        %v1556 = vrcp.pop %v1555
        %v1557 = vmul.f32 %v1555, %v1556
        %v1558 = vsub.f32 2.0, %v1557
        %v1559 = vmul.f32 %v1556, %v1558
        %v1560 = vmul.f32 %v1552, %v1559
        %1561 = vrot.lane.b32.xlu0 %v727, 40
        %v1562 = vpop.permute.xlu0 %1561
        %v1565 = vsel %vm742, %v1560, 0
        %1567 = vmatprep.subr.mxu0 0.0
        %1568 = vmatpush1.msra.mxu0 %v1562
        %1569 = vmatprep.subr.mxu0 0.0
        %1570 = vmatpush1.msra.mxu0 0.0
        %1571 = vmatprep.subr.mxu0 0.0
        %1572 = vmatpush1.msra.mxu0 0.0
        %1573 = vmatprep.subr.mxu0 0.0
        %1574 = vmatpush1.msra.mxu0 0.0
        %1575 = vmatprep.subr.mxu0 0.0
        %1576 = vmatpush1.msra.mxu0 0.0
        %1577 = vmatprep.subr.mxu0 0.0
        %1578 = vmatpush1.msra.mxu0 0.0
        %1579 = vmatprep.subr.mxu0 0.0
        %1580 = vmatpush1.msra.mxu0 0.0
        %1581 = vmatprep.subr.mxu0 0.0
        %1582 = vmatpush1.msra.mxu0 0.0
        %1583 = vmatprep.subr.mxu0 0.0
        %1584 = vmatpush1.msra.mxu0 0.0
        %1585 = vmatprep.subr.mxu0 0.0
        %1586 = vmatpush1.msra.mxu0 0.0
        %1587 = vmatprep.subr.mxu0 0.0
        %1588 = vmatpush1.msra.mxu0 0.0
        %1589 = vmatprep.subr.mxu0 0.0
        %1590 = vmatpush1.msra.mxu0 0.0
        %1591 = vmatprep.subr.mxu0 0.0
        %1592 = vmatpush1.msra.mxu0 0.0
        %1593 = vmatprep.subr.mxu0 0.0
        %1594 = vmatpush1.msra.mxu0 0.0
        %1595 = vmatprep.subr.mxu0 0.0
        %1596 = vmatpush1.msra.mxu0 0.0
        %1597 = vmatprep.subr.mxu0 0.0
        %1598 = vmatpush1.msra.mxu0 0.0
        %1599 = vmatprep.subr.mxu0 0.0
        %1600 = vmatpush1.msra.mxu0 0.0
        %1601 = vmatprep.subr.mxu0 0.0
        %1602 = vmatpush1.msra.mxu0 0.0
        %1603 = vmatprep.subr.mxu0 0.0
        %1604 = vmatpush1.msra.mxu0 0.0
        %1605 = vmatprep.subr.mxu0 0.0
        %1606 = vmatpush1.msra.mxu0 0.0
        %1607 = vmatprep.subr.mxu0 0.0
        %1608 = vmatpush1.msra.mxu0 0.0
        %1609 = vmatprep.subr.mxu0 0.0
        %1610 = vmatpush1.msra.mxu0 0.0
        %1611 = vmatprep.subr.mxu0 0.0
        %1612 = vmatpush1.msra.mxu0 0.0
        %1613 = vmatprep.subr.mxu0 0.0
        %1614 = vmatpush1.msra.mxu0 0.0
        %1615 = vmatprep.subr.mxu0 0.0
        %1616 = vmatpush1.msra.mxu0 0.0
        %1617 = vmatprep.subr.mxu0 0.0
        %1618 = vmatpush1.msra.mxu0 0.0
        %1619 = vmatprep.subr.mxu0 0.0
        %1620 = vmatpush1.msra.mxu0 0.0
        %1621 = vmatprep.subr.mxu0 0.0
        %1622 = vmatpush1.msra.mxu0 0.0
        %1623 = vmatprep.subr.mxu0 0.0
        %1624 = vmatpush1.msra.mxu0 0.0
        %1625 = vmatprep.subr.mxu0 0.0
        %1626 = vmatpush1.msra.mxu0 0.0
        %1627 = vmatprep.subr.mxu0 0.0
        %1628 = vmatpush1.msra.mxu0 0.0
        %1629 = vmatprep.subr.mxu0 0.0
        %1630 = vmatpush1.msra.mxu0 0.0
        %1631 = vmatprep.mubr.f32.mxu0 0.0
        %1632 = vmatmul.mubr.f32.gmra.mrb[0].mxu0 %v1565
        %v1633 = vpop.f32.mrb[0].mxu0
        %v1634 = vadd.f32 0.0, %v1633
        %v1635 = vpop.f32.mrb[0].mxu0
        %1636 = vdwg.mxu0
        %v1637 = vld [vmem:[#allocation11 + $0x18] sm:$0xff]
        %v1639 = vsel %vm742, %v1634, 0
        %1641 = vmatprep.subr.mxu0 0.0
        %1642 = vmatpush1.msra.mxu0 %v1637
        %1643 = vmatprep.subr.mxu0 0.0
        %1644 = vmatpush1.msra.mxu0 0.0
        %1645 = vmatprep.subr.mxu0 0.0
        %1646 = vmatpush1.msra.mxu0 0.0
        %1647 = vmatprep.subr.mxu0 0.0
        %1648 = vmatpush1.msra.mxu0 0.0
        %1649 = vmatprep.subr.mxu0 0.0
        %1650 = vmatpush1.msra.mxu0 0.0
        %1651 = vmatprep.subr.mxu0 0.0
        %1652 = vmatpush1.msra.mxu0 0.0
        %1653 = vmatprep.subr.mxu0 0.0
        %1654 = vmatpush1.msra.mxu0 0.0
        %1655 = vmatprep.subr.mxu0 0.0
        %1656 = vmatpush1.msra.mxu0 0.0
        %1657 = vmatprep.subr.mxu0 0.0
        %1658 = vmatpush1.msra.mxu0 0.0
        %1659 = vmatprep.subr.mxu0 0.0
        %1660 = vmatpush1.msra.mxu0 0.0
        %1661 = vmatprep.subr.mxu0 0.0
        %1662 = vmatpush1.msra.mxu0 0.0
        %1663 = vmatprep.subr.mxu0 0.0
        %1664 = vmatpush1.msra.mxu0 0.0
        %1665 = vmatprep.subr.mxu0 0.0
        %1666 = vmatpush1.msra.mxu0 0.0
        %1667 = vmatprep.subr.mxu0 0.0
        %1668 = vmatpush1.msra.mxu0 0.0
        %1669 = vmatprep.subr.mxu0 0.0
        %1670 = vmatpush1.msra.mxu0 0.0
        %1671 = vmatprep.subr.mxu0 0.0
        %1672 = vmatpush1.msra.mxu0 0.0
        %1673 = vmatprep.subr.mxu0 0.0
        %1674 = vmatpush1.msra.mxu0 0.0
        %1675 = vmatprep.subr.mxu0 0.0
        %1676 = vmatpush1.msra.mxu0 0.0
        %1677 = vmatprep.subr.mxu0 0.0
        %1678 = vmatpush1.msra.mxu0 0.0
        %1679 = vmatprep.subr.mxu0 0.0
        %1680 = vmatpush1.msra.mxu0 0.0
        %1681 = vmatprep.subr.mxu0 0.0
        %1682 = vmatpush1.msra.mxu0 0.0
        %1683 = vmatprep.subr.mxu0 0.0
        %1684 = vmatpush1.msra.mxu0 0.0
        %1685 = vmatprep.subr.mxu0 0.0
        %1686 = vmatpush1.msra.mxu0 0.0
        %1687 = vmatprep.subr.mxu0 0.0
        %1688 = vmatpush1.msra.mxu0 0.0
        %1689 = vmatprep.subr.mxu0 0.0
        %1690 = vmatpush1.msra.mxu0 0.0
        %1691 = vmatprep.subr.mxu0 0.0
        %1692 = vmatpush1.msra.mxu0 0.0
        %1693 = vmatprep.subr.mxu0 0.0
        %1694 = vmatpush1.msra.mxu0 0.0
        %1695 = vmatprep.subr.mxu0 0.0
        %1696 = vmatpush1.msra.mxu0 0.0
        %1697 = vmatprep.subr.mxu0 0.0
        %1698 = vmatpush1.msra.mxu0 0.0
        %1699 = vmatprep.subr.mxu0 0.0
        %1700 = vmatpush1.msra.mxu0 0.0
        %1701 = vmatprep.subr.mxu0 0.0
        %1702 = vmatpush1.msra.mxu0 0.0
        %1703 = vmatprep.subr.mxu0 0.0
        %1704 = vmatpush1.msra.mxu0 0.0
        %1705 = vmatprep.mubr.f32.mxu0 0.0
        %1706 = vmatmul.mubr.f32.gmra.mrb[0].mxu0 %v1639
        %v1707 = vpop.f32.mrb[0].mxu0
        %v1708 = vadd.f32 0.0, %v1707
        %v1709 = vpop.f32.mrb[0].mxu0
        %1710 = vdwg.mxu0
        %v1711 = vadd.f32 %v1468, %v1708
        %v1712 = vld [vmem:[#allocation14] sm:$0x1]
        %v1713 = vld [vmem:[#allocation16] sm:$0x1]
        %v1714 = vsel %vm617, %v1711, 0.0
        %1715 = vadd.xlane.f32.xlu0 %v1714
        %v1716 = vpop.xlane.xlu0 %1715
        %v1717 = vmul.f32 %v1716, %v621
        %v1718 = vsub.f32 %v1711, %v1717
        %v1719 = vmul.f32 %v1718, %v1718
        %v1720 = vsel %vm617, %v1719, 0.0
        %1721 = vadd.xlane.f32.xlu0 %v1720
        %v1722 = vpop.xlane.xlu0 %1721
        %v1723 = vmul.f32 %v1722, %v621
        %v1724 = vadd.f32 %v1723, 1e-05
        %v1725 = vrsqrt.pop %v1724
        %v1726 = vmul.f32 %v1718, %v1725
        %v1728 = vlaneseq
        %v1729 = vshrl.u32 %v1728, 7
        %v1730 = vsub.s32 0, %v1729
        %v1731 = vrot.slane %v1712, %v1730
        %v1733 = vmul.f32 %v1726, %v1731
        %v1735 = vlaneseq
        %v1736 = vshrl.u32 %v1735, 7
        %v1737 = vsub.s32 0, %v1736
        %v1738 = vrot.slane %v1713, %v1737
        %v1740 = vadd.f32 %v1733, %v1738
        %v1741 = vld [vmem:[#allocation17] sm:$0xff]
        %v1742 = vld [vmem:[#allocation17 + $0x8] sm:$0xff]
        %v1743 = vld [vmem:[#allocation17 + $0x10] sm:$0xff]
        %v1744 = vld [vmem:[#allocation17 + $0x18] sm:$0xff]
        %v1745 = vld [vmem:[#allocation19] sm:$0x1]
        %v1747 = vlaneseq
        %v1748 = vshrl.u32 %v1747, 7
        %v1749 = vsub.s32 0, %v1748
        %v1750 = vrot.slane %v1745, %v1749
        %v1753 = vsel %vm617, %v1740, 0
        %1755 = vmatprep.subr.mxu0 0.0
        %1756 = vmatpush1.msra.mxu0 %v1741
        %1757 = vmatprep.subr.mxu0 0.0
        %1758 = vmatpush1.msra.mxu0 %v1742
        %1759 = vmatprep.subr.mxu0 0.0
        %1760 = vmatpush1.msra.mxu0 %v1743
        %1761 = vmatprep.subr.mxu0 0.0
        %1762 = vmatpush1.msra.mxu0 %v1744
        %1763 = vmatprep.subr.mxu0 0.0
        %1764 = vmatpush1.msra.mxu0 0.0
        %1765 = vmatprep.subr.mxu0 0.0
        %1766 = vmatpush1.msra.mxu0 0.0
        %1767 = vmatprep.subr.mxu0 0.0
        %1768 = vmatpush1.msra.mxu0 0.0
        %1769 = vmatprep.subr.mxu0 0.0
        %1770 = vmatpush1.msra.mxu0 0.0
        %1771 = vmatprep.subr.mxu0 0.0
        %1772 = vmatpush1.msra.mxu0 0.0
        %1773 = vmatprep.subr.mxu0 0.0
        %1774 = vmatpush1.msra.mxu0 0.0
        %1775 = vmatprep.subr.mxu0 0.0
        %1776 = vmatpush1.msra.mxu0 0.0
        %1777 = vmatprep.subr.mxu0 0.0
        %1778 = vmatpush1.msra.mxu0 0.0
        %1779 = vmatprep.subr.mxu0 0.0
        %1780 = vmatpush1.msra.mxu0 0.0
        %1781 = vmatprep.subr.mxu0 0.0
        %1782 = vmatpush1.msra.mxu0 0.0
        %1783 = vmatprep.subr.mxu0 0.0
        %1784 = vmatpush1.msra.mxu0 0.0
        %1785 = vmatprep.subr.mxu0 0.0
        %1786 = vmatpush1.msra.mxu0 0.0
        %1787 = vmatprep.subr.mxu0 0.0
        %1788 = vmatpush1.msra.mxu0 0.0
        %1789 = vmatprep.subr.mxu0 0.0
        %1790 = vmatpush1.msra.mxu0 0.0
        %1791 = vmatprep.subr.mxu0 0.0
        %1792 = vmatpush1.msra.mxu0 0.0
        %1793 = vmatprep.subr.mxu0 0.0
        %1794 = vmatpush1.msra.mxu0 0.0
        %1795 = vmatprep.subr.mxu0 0.0
        %1796 = vmatpush1.msra.mxu0 0.0
        %1797 = vmatprep.subr.mxu0 0.0
        %1798 = vmatpush1.msra.mxu0 0.0
        %1799 = vmatprep.subr.mxu0 0.0
        %1800 = vmatpush1.msra.mxu0 0.0
        %1801 = vmatprep.subr.mxu0 0.0
        %1802 = vmatpush1.msra.mxu0 0.0
        %1803 = vmatprep.subr.mxu0 0.0
        %1804 = vmatpush1.msra.mxu0 0.0
        %1805 = vmatprep.subr.mxu0 0.0
        %1806 = vmatpush1.msra.mxu0 0.0
        %1807 = vmatprep.subr.mxu0 0.0
        %1808 = vmatpush1.msra.mxu0 0.0
        %1809 = vmatprep.subr.mxu0 0.0
        %1810 = vmatpush1.msra.mxu0 0.0
        %1811 = vmatprep.subr.mxu0 0.0
        %1812 = vmatpush1.msra.mxu0 0.0
        %1813 = vmatprep.subr.mxu0 0.0
        %1814 = vmatpush1.msra.mxu0 0.0
        %1815 = vmatprep.subr.mxu0 0.0
        %1816 = vmatpush1.msra.mxu0 0.0
        %1817 = vmatprep.subr.mxu0 0.0
        %1818 = vmatpush1.msra.mxu0 0.0
        %1819 = vmatprep.mubr.f32.mxu0 0.0
        %1820 = vmatmul.mubr.f32.gmra.mrb[0].mxu0 %v1753
        %v1821 = vpop.f32.mrb[0].mxu0
        %v1822 = vadd.f32 %v1750, %v1821
        %v1823 = vpop.f32.mrb[0].mxu0
        %1824 = vdwg.mxu0
        %v1825 = vmax.f32 %v1822, 0.0
        %v1826 = vld [vmem:[#allocation20] sm:$0xff]
        %v1827 = vld [vmem:[#allocation20 + $0x8] sm:$0xff]
        %v1828 = vld [vmem:[#allocation20 + $0x10] sm:$0xff]
        %v1829 = vld [vmem:[#allocation20 + $0x18] sm:$0xff]
        %v1830 = vld [vmem:[#allocation20 + $0x20] sm:$0xff]
        %v1831 = vld [vmem:[#allocation20 + $0x28] sm:$0xff]
        %v1832 = vld [vmem:[#allocation20 + $0x30] sm:$0xff]
        %v1833 = vld [vmem:[#allocation20 + $0x38] sm:$0xff]
        %v1834 = vld [vmem:[#allocation20 + $0x40] sm:$0xff]
        %v1835 = vld [vmem:[#allocation20 + $0x48] sm:$0xff]
        %v1836 = vld [vmem:[#allocation20 + $0x50] sm:$0xff]
        %v1837 = vld [vmem:[#allocation20 + $0x58] sm:$0xff]
        %v1838 = vld [vmem:[#allocation20 + $0x60] sm:$0xff]
        %v1839 = vld [vmem:[#allocation20 + $0x68] sm:$0xff]
        %v1840 = vld [vmem:[#allocation20 + $0x70] sm:$0xff]
        %v1841 = vld [vmem:[#allocation20 + $0x78] sm:$0xff]
        %1842 = vmatprep.subr.mxu0 0.0
        %1843 = vmatpush1.msra.mxu0 %v1826
        %1844 = vmatprep.subr.mxu0 0.0
        %1845 = vmatpush1.msra.mxu0 %v1827
        %1846 = vmatprep.subr.mxu0 0.0
        %1847 = vmatpush1.msra.mxu0 %v1828
        %1848 = vmatprep.subr.mxu0 0.0
        %1849 = vmatpush1.msra.mxu0 %v1829
        %1850 = vmatprep.subr.mxu0 0.0
        %1851 = vmatpush1.msra.mxu0 %v1830
        %1852 = vmatprep.subr.mxu0 0.0
        %1853 = vmatpush1.msra.mxu0 %v1831
        %1854 = vmatprep.subr.mxu0 0.0
        %1855 = vmatpush1.msra.mxu0 %v1832
        %1856 = vmatprep.subr.mxu0 0.0
        %1857 = vmatpush1.msra.mxu0 %v1833
        %1858 = vmatprep.subr.mxu0 0.0
        %1859 = vmatpush1.msra.mxu0 %v1834
        %1860 = vmatprep.subr.mxu0 0.0
        %1861 = vmatpush1.msra.mxu0 %v1835
        %1862 = vmatprep.subr.mxu0 0.0
        %1863 = vmatpush1.msra.mxu0 %v1836
        %1864 = vmatprep.subr.mxu0 0.0
        %1865 = vmatpush1.msra.mxu0 %v1837
        %1866 = vmatprep.subr.mxu0 0.0
        %1867 = vmatpush1.msra.mxu0 %v1838
        %1868 = vmatprep.subr.mxu0 0.0
        %1869 = vmatpush1.msra.mxu0 %v1839
        %1870 = vmatprep.subr.mxu0 0.0
        %1871 = vmatpush1.msra.mxu0 %v1840
        %1872 = vmatprep.subr.mxu0 0.0
        %1873 = vmatpush1.msra.mxu0 %v1841
        %1874 = vmatprep.subr.mxu0 0.0
        %1875 = vmatpush1.msra.mxu0 0.0
        %1876 = vmatprep.subr.mxu0 0.0
        %1877 = vmatpush1.msra.mxu0 0.0
        %1878 = vmatprep.subr.mxu0 0.0
        %1879 = vmatpush1.msra.mxu0 0.0
        %1880 = vmatprep.subr.mxu0 0.0
        %1881 = vmatpush1.msra.mxu0 0.0
        %1882 = vmatprep.subr.mxu0 0.0
        %1883 = vmatpush1.msra.mxu0 0.0
        %1884 = vmatprep.subr.mxu0 0.0
        %1885 = vmatpush1.msra.mxu0 0.0
        %1886 = vmatprep.subr.mxu0 0.0
        %1887 = vmatpush1.msra.mxu0 0.0
        %1888 = vmatprep.subr.mxu0 0.0
        %1889 = vmatpush1.msra.mxu0 0.0
        %1890 = vmatprep.subr.mxu0 0.0
        %1891 = vmatpush1.msra.mxu0 0.0
        %1892 = vmatprep.subr.mxu0 0.0
        %1893 = vmatpush1.msra.mxu0 0.0
        %1894 = vmatprep.subr.mxu0 0.0
        %1895 = vmatpush1.msra.mxu0 0.0
        %1896 = vmatprep.subr.mxu0 0.0
        %1897 = vmatpush1.msra.mxu0 0.0
        %1898 = vmatprep.subr.mxu0 0.0
        %1899 = vmatpush1.msra.mxu0 0.0
        %1900 = vmatprep.subr.mxu0 0.0
        %1901 = vmatpush1.msra.mxu0 0.0
        %1902 = vmatprep.subr.mxu0 0.0
        %1903 = vmatpush1.msra.mxu0 0.0
        %1904 = vmatprep.subr.mxu0 0.0
        %1905 = vmatpush1.msra.mxu0 0.0
        %1906 = vmatprep.mubr.f32.mxu0 0.0
        %1907 = vmatmul.mubr.f32.gmra.mrb[0].mxu0 %v1825
        %v1908 = vpop.f32.mrb[0].mxu0
        %v1909 = vadd.f32 0.0, %v1908
        %v1910 = vpop.f32.mrb[0].mxu0
        %1911 = vdwg.mxu0
        %v1912 = vadd.f32 %v1711, %v1909
        %v1913 = vld [vmem:[#allocation22] sm:$0x1]
        %v1915 = vlaneseq
        %v1916 = vshrl.u32 %v1915, 7
        %v1917 = vsub.s32 0, %v1916
        %v1918 = vrot.slane %v1913, %v1917
        %v1920 = vadd.f32 %v1912, %v1918
        %1921 = vst.msk [vmem:[%s613] sm:$0xff] %vm617, %v1920
        %s1922 = sand.u32 %s322, 1
        %s1923 = scalar_lea.sflag [#allocation4], %s1922
        %s1924 = sand.u32 %s322, 1
        %s1925 = smul.addr %s1924, 8
        %s1926 = scalar_lea.vmem [#allocation23], %s1925
        // Predicated region
        $region125: #{tpu_custom_call.1} parent=71 // pred_check
          %p1927 = pneg %p332
        $region126: #{tpu_custom_call.1} parent=71 // pred_check_branch
          %1929 = sbr.rel (%p1927) target = $region128
        $region127: #{tpu_custom_call.1} parent=71 // pred_region
          %s1931 = ssub.s32 128, 128
          %1932 = vsyncadd %s1923, %s1931
          %s1933 = smul.addr %s36, 128
          %s1934 = scalar_lea.hbm %s13, %s1933
          %s1936 = sshll.u32 %s1926, 4
          %s1937 = int_to_ptr.vmem [resolvable:$true] %s1936
          %1939 = dma.vmem_to_hbm [thread:$0]  %s1937, 128, %s1934, %s1923
        $region128: #{tpu_custom_call.1} parent=71 // pred_fallthru
          _
      $region72: #{tpu_custom_call.1} parent=5 // pred_fallthru
        _
      %p1940 = scmp.le.s32.totalorder 2, %s31
      // Predicated region
      $region129: #{tpu_custom_call.1} parent=5 // pred_check
        %p1941 = pneg %p1940
      $region130: #{tpu_custom_call.1} parent=5 // pred_check_branch
        %1943 = sbr.rel (%p1941) target = $region132
      $region131: #{tpu_custom_call.1} parent=5 // pred_region
        %s1944 = ssub.s32 %s31, 2
        // Predicated region
        $region133: #{tpu_custom_call.1} parent=131 // pred_check
          %p1945 = pneg %p338
        $region134: #{tpu_custom_call.1} parent=131 // pred_check_branch
          %1947 = sbr.rel (%p1945) target = $region136
        $region135: #{tpu_custom_call.1} parent=131 // pred_region
          %s1948 = sand.u32 %s323, 1
          %s1949 = scalar_lea.sflag [#allocation4], %s1948
          %s1950 = sand.u32 %s323, 1
          %s1951 = smul.addr %s1950, 8
          %s1952 = scalar_lea.vmem [#allocation23], %s1951
          %1953 = dma.done %s1949, 128
        $region136: #{tpu_custom_call.1} parent=131 // pred_fallthru
          _
      $region132: #{tpu_custom_call.1} parent=5 // pred_fallthru
        _
    $region6: #{tpu_custom_call.1} parent=1 // loop_footer
      %s35 = sadd.s32 1, %s31
    $region7: #{tpu_custom_call.1} parent=1 // loop_footer_branch
      %30 = sbr.rel target = $region3
    $region8: #{tpu_custom_call.1} parent=1 // loop_exit
      _
    %1954 = vsyncpa [#allocation3], 1
    %s1955 = scalar_lea.sflag [#allocation3], 1
    %1956 = vsyncpa %s1955, 1
    %1957 = vsyncpa [#allocation6], 1
    %1958 = vsyncpa [#allocation9], 1
    %1959 = vsyncpa [#allocation12], 1
    %1960 = vsyncpa [#allocation15], 1
    %1961 = vsyncpa [#allocation18], 1
    %1962 = vsyncpa [#allocation21], 1
    %1963 = vsyncpa [#allocation4], 1
    %s1964 = scalar_lea.sflag [#allocation4], 1
    %1965 = vsyncpa %s1964, 1

</llo_original>
